<compile_context>
chip_gen: v5e
topology: v5e:2x2
jax: 0.10.0
libtpu: 0.0.40
codegen_flags: <defaults>
</compile_context>

<pallas_src>
import math
import functools
import numpy as np

import jax
import jax.numpy as jnp
from jax.experimental import pallas as pl
from jax.experimental.pallas import tpu as pltpu

# ------------------------- model hyper-parameters -------------------------
B = 2          # batch
BPAD = 8       # batch padded to a full 8-sublane tile (rows B..7 masked to 0)
MAX_LEN = 8    # max_length (T)
WORD_DIM = 16  # word_vec_dim (D)
HIDDEN = 32    # hidden_size (H)
ATT_DIM = 16   # att_dim (A)
WORD_COUNT = 50
UNK_IDX = WORD_COUNT
BLK_IDX = WORD_COUNT + 1


# ------------------------------ Pallas kernel -----------------------------
def _att_bilstm_kernel(emb_ref, mask_ref, wi_ref, wh_ref, b_ref, w1_ref, w2_ref,
                       out_ref):
    TB = emb_ref.shape[0]              # T * Bp
    Bp, H2 = out_ref.shape             # (Bp, 2H)
    H = H2 // 2
    T = TB // Bp
    f32 = jnp.float32
    bf16 = jnp.bfloat16

    # (1) Input projections for both directions and all timesteps: ONE matmul.
    #     Row s*Bp + b holds [x_s | x_{T-1-s}] @ Wi_blk + bias, gate blocks
    #     ordered [i_f i_b | f_f f_b | o_f o_b | g_f g_b] (each 2H wide).
    gin = jnp.dot(emb_ref[...], wi_ref[...],
                  preferred_element_type=f32) + b_ref[...]          # [T*Bp, 8H] f32

    wh = wh_ref[...]                   # [2H, 8H] bf16 block-diagonal recurrent weight
    mask = mask_ref[...] > 0.5         # [T*Bp, 2H] bool validity (fwd half | bwd half)

    h = jnp.zeros((Bp, H2), f32)       # [h_fwd | h_bwd], carried in vregs
    c = jnp.zeros((Bp, H2), f32)
    zeros = jnp.zeros((Bp, H2), f32)

    outs_f = []                        # forward-dir outputs, time order s = 0..T-1
    outs_b = []                        # backward-dir outputs for time index T-1-s

    # (2) Fused fwd+bwd recurrence, fully unrolled (T small & static):
    #     one [Bp,2H] @ [2H,8H] MXU op + one wide sigmoid + one tanh per step.
    #     All per-step slices are tile-aligned full 8-sublane views (Bp == 8).
    # TODO(synk): on v5e, stage wh in the MXU across the 8 steps
    # (pltpu.matmul_push_rhs once, matmul_acc_lhs/matmul_pop per step, 8H=256
    # split into two 128-column pushes) to lift per-step weight-load latency
    # off the serial h->h chain.
    for s in range(T):
        rows = slice(s * Bp, (s + 1) * Bp)
        g = gin[rows, :] + jnp.dot(h.astype(bf16), wh,
                                   preferred_element_type=f32)      # [Bp, 8H]
        sg = jax.nn.sigmoid(g[:, 0:3 * H2])        # i | f | o gates, one wide EUP op
        gg = jnp.tanh(g[:, 3 * H2:4 * H2])         # cell candidate
        i_g = sg[:, 0:H2]
        f_g = sg[:, H2:2 * H2]
        o_g = sg[:, 2 * H2:3 * H2]
        c_new = f_g * c + i_g * gg
        h_new = o_g * jnp.tanh(c_new)
        msk = mask[rows, :]                        # True where this step is valid
        h = jnp.where(msk, h_new, h)               # freeze state on padded steps
        c = jnp.where(msk, c_new, c)
        out_t = jnp.where(msk, h_new, zeros)       # padded positions -> 0
        outs_f.append(out_t[:, 0:H])               # fwd half is output for time s
        outs_b.append(out_t[:, H:H2])              # bwd half is output for time T-1-s

    # BiLSTM output for time t = [fwd(t) | bwd(t)]; the bwd-dir step s produced
    # the output for time T-1-s, so reverse that list. Everything stays in vregs.
    seq_rows = [jnp.concatenate([outs_f[t], outs_b[T - 1 - t]], axis=-1)
                for t in range(T)]                                   # T x [Bp, 2H]
    seq2 = jnp.concatenate(seq_rows, axis=0)                         # [T*Bp, 2H] time-major

    # (3) Attention epilogue: one matmul + lane reduce for all positions, then a
    #     softmax over T using only aligned full-tile (8, .) values.
    ah = jnp.tanh(jnp.dot(seq2.astype(bf16), w1_ref[...],
                          preferred_element_type=f32))               # [T*Bp, A]
    sc = jnp.sum(ah * w2_ref[...], axis=-1, keepdims=True)           # [T*Bp, 1]
    sc_rows = [sc[t * Bp:(t + 1) * Bp, :] for t in range(T)]         # aligned views

    m = functools.reduce(jnp.maximum, sc_rows)                       # [Bp, 1]
    e_rows = [jnp.exp(s_t - m) for s_t in sc_rows]
    den = functools.reduce(jnp.add, e_rows)                          # [Bp, 1]
    acc = functools.reduce(jnp.add,
                           [e * r for e, r in zip(e_rows, seq_rows)])  # [Bp, 2H]
    # approx reciprocal: EUP vrcp, ~1e-3 rel error vs exact division (documented).
    out_ref[...] = acc * pl.reciprocal(den, approx=True)


# --------------------- host-side weight / input re-layout ------------------
def _fuse_gate_weights(w_f, w_b, hidden):
    """w_f, w_b: [rows, 4H] with nn.LSTM gate order (i, f, g, o).
    Returns block matrix [rows_f + rows_b, 8H] with columns ordered
    [i_f i_b | f_f f_b | o_f o_b | g_f g_b], fwd rows on top / bwd rows below."""
    H = hidden
    order = (0, 1, 3, 2)                        # i, f, o, g
    zf = jnp.zeros((w_f.shape[0], H), w_f.dtype)
    zb = jnp.zeros((w_b.shape[0], H), w_b.dtype)
    top, bot = [], []
    for k in order:
        top += [w_f[:, k * H:(k + 1) * H], zf]
        bot += [zb, w_b[:, k * H:(k + 1) * H]]
    return jnp.concatenate([jnp.concatenate(top, axis=1),
                            jnp.concatenate(bot, axis=1)], axis=0)


def _fuse_gate_bias(b_f, b_b, hidden):
    H = hidden
    order = (0, 1, 3, 2)
    parts = []
    for k in order:
        parts += [b_f[:, k * H:(k + 1) * H], b_b[:, k * H:(k + 1) * H]]
    return jnp.concatenate(parts, axis=1)


# ------------------------------ host wrapper ------------------------------
def att_bilstm_forward(tokens, lengths, params):
    """tokens, lengths: [B, max_length] int32 -> sentence embedding [B, 2H] f32."""
    Bsz, T = tokens.shape
    D, H, A = WORD_DIM, HIDDEN, ATT_DIM
    Bp = BPAD

    # --- glue: embedding gather, batch padding to 8 rows, padding masks, fused
    #     weight layout.  Padded batch rows (lens = 0) are fully masked so they
    #     cost nothing semantically and make every in-kernel slice tile-aligned.
    emb = jnp.take(params["emb"], tokens, axis=0).astype(jnp.float32)       # [B, T, D]
    emb_t = jnp.transpose(emb, (1, 0, 2))                                   # [T, B, D] time-major
    emb_t = jnp.pad(emb_t, ((0, 0), (0, Bp - Bsz), (0, 0)))                 # [T, Bp, D]
    emb_cat = jnp.concatenate([emb_t, emb_t[::-1]], axis=-1)                # [T, Bp, 2D] (fwd | bwd inputs)
    emb_cat = emb_cat.reshape(T * Bp, 2 * D).astype(jnp.bfloat16)

    lens = jnp.pad(lengths[:, 0].astype(jnp.int32), (0, Bp - Bsz))          # [Bp] (padded rows: 0)
    step = jnp.arange(T, dtype=jnp.int32)[:, None]                          # [T, 1]
    mf = (step < lens[None, :]).astype(jnp.float32)                         # fwd step s valid
    mb = ((T - 1 - step) < lens[None, :]).astype(jnp.float32)               # bwd step s valid
    mask = jnp.concatenate([jnp.broadcast_to(mf[:, :, None], (T, Bp, H)),
                            jnp.broadcast_to(mb[:, :, None], (T, Bp, H))], axis=-1)
    mask = mask.reshape(T * Bp, 2 * H)
    # TODO(synk): the mask could instead be built in-kernel from scalar-prefetched
    # lengths (broadcasted_iota + compare) to drop this HBM->VMEM input.

    wi_blk = _fuse_gate_weights(params["wi_f"], params["wi_b"], H).astype(jnp.bfloat16)  # [2D, 8H]
    wh_blk = _fuse_gate_weights(params["wh_f"], params["wh_b"], H).astype(jnp.bfloat16)  # [2H, 8H]
    b_blk = _fuse_gate_bias(params["b_f"], params["b_b"], H).astype(jnp.float32)         # [1, 8H]
    w1 = params["w1"].astype(jnp.bfloat16)                                               # [2H, A]
    w2_row = params["w2"].reshape(1, A).astype(jnp.float32)                              # [1, A]

    vmem = lambda: pl.BlockSpec(memory_space=pltpu.MemorySpace.VMEM)
    out = pl.pallas_call(
        _att_bilstm_kernel,
        out_shape=jax.ShapeDtypeStruct((Bp, 2 * H), jnp.float32),
        in_specs=[vmem() for _ in range(7)],
        out_specs=vmem(),
    )(emb_cat, mask, wi_blk, wh_blk, b_blk, w1, w2_row)
    # TODO(synk): for large batches add a leading batch-grid axis with
    # dimension_semantics=("parallel",) (so v7x's two TensorCores are used) and
    # size the batch tile against v7x's 64 MiB VMEM; unnecessary at B=2.
    return out[:Bsz]


# ------------------------- deterministic parameters ------------------------
def init_params():
    key = jax.random.PRNGKey(0)
    ks = jax.random.split(key, 12)
    emb = jax.random.normal(ks[0], (WORD_COUNT + 2, WORD_DIM), jnp.float32) / math.sqrt(WORD_DIM)
    emb = emb.at[BLK_IDX].set(0.0)   # padding_idx row is zero
    k = 1.0 / math.sqrt(HIDDEN)

    def u(kk, shape):
        return jax.random.uniform(kk, shape, jnp.float32, -k, k)

    params = dict(
        emb=emb,
        wi_f=u(ks[1], (WORD_DIM, 4 * HIDDEN)),
        wh_f=u(ks[2], (HIDDEN, 4 * HIDDEN)),
        b_f=u(ks[3], (1, 4 * HIDDEN)) + u(ks[4], (1, 4 * HIDDEN)),
        wi_b=u(ks[5], (WORD_DIM, 4 * HIDDEN)),
        wh_b=u(ks[6], (HIDDEN, 4 * HIDDEN)),
        b_b=u(ks[7], (1, 4 * HIDDEN)) + u(ks[8], (1, 4 * HIDDEN)),
        w1=u(ks[9], (2 * HIDDEN, ATT_DIM)),
        w2=u(ks[10], (ATT_DIM, 1)),
    )
    return params, ks[11]


# ---------------------------- numpy reference ------------------------------
def reference_forward(tokens, lengths, params):
    tokens = np.asarray(tokens)
    lens = np.asarray(lengths)[:, 0]
    emb_tab = np.asarray(params["emb"], np.float32)
    wi_f, wh_f, b_f = (np.asarray(params[n], np.float32) for n in ("wi_f", "wh_f", "b_f"))
    wi_b, wh_b, b_b = (np.asarray(params[n], np.float32) for n in ("wi_b", "wh_b", "b_b"))
    w1, w2 = np.asarray(params["w1"], np.float32), np.asarray(params["w2"], np.float32)

    def sigmoid(x):
        return 1.0 / (1.0 + np.exp(-x))

    def cell(x, h, c, wi, wh, bb):
        g = x @ wi + h @ wh + bb[0]
        hh = h.shape[0]
        i, f = sigmoid(g[:hh]), sigmoid(g[hh:2 * hh])
        gg, o = np.tanh(g[2 * hh:3 * hh]), sigmoid(g[3 * hh:])
        c = f * c + i * gg
        h = o * np.tanh(c)
        return h, c

    bsz, t_len = tokens.shape
    H = wh_f.shape[0]
    emb = emb_tab[tokens]
    out = np.zeros((bsz, t_len, 2 * H), np.float32)
    for b in range(bsz):
        L = int(lens[b])
        h = np.zeros(H, np.float32); c = np.zeros(H, np.float32)
        for t in range(L):
            h, c = cell(emb[b, t], h, c, wi_f, wh_f, b_f)
            out[b, t, :H] = h
        h = np.zeros(H, np.float32); c = np.zeros(H, np.float32)
        for t in range(L - 1, -1, -1):
            h, c = cell(emb[b, t], h, c, wi_b, wh_b, b_b)
            out[b, t, H:] = h
    ah = np.tanh(out @ w1)
    sc = ah @ w2                                            # [B, T, 1]
    e = np.exp(sc - sc.max(axis=1, keepdims=True))
    p = e / e.sum(axis=1, keepdims=True)
    return (p * out).sum(axis=1)


# ---------------------------------- main -----------------------------------
if __name__ == "__main__":
    params, data_key = init_params()

    # Deterministic example inputs, consistent with tokenize(): pad with BLK_IDX,
    # lengths replicated across the max_length axis.
    lens_val = jnp.array([5, 8], jnp.int32)
    tokens = jax.random.randint(data_key, (B, MAX_LEN), 0, WORD_COUNT, jnp.int32)
    pos = jnp.arange(MAX_LEN, dtype=jnp.int32)[None, :]
    tokens = jnp.where(pos < lens_val[:, None], tokens, BLK_IDX)
    lengths = jnp.broadcast_to(lens_val[:, None], (B, MAX_LEN)).astype(jnp.int32)

    out = att_bilstm_forward(tokens, lengths, params)
    out = jax.block_until_ready(out)

    ref = reference_forward(tokens, lengths, params)
    np.testing.assert_allclose(np.asarray(out), ref, rtol=2e-2, atol=2e-2)
    assert out.shape == (B, 2 * HIDDEN)

    print("KERNEL_OK")
</pallas_src>

<mosaic_0001>
module attributes {stable_mosaic.version = 11 : i64} {
  func.func @_att_bilstm_kernel(%arg0: memref<64x32xbf16, #tpu.memory_space<vmem>>, %arg1: memref<64x64xf32, #tpu.memory_space<vmem>>, %arg2: memref<32x256xbf16, #tpu.memory_space<vmem>>, %arg3: memref<64x256xbf16, #tpu.memory_space<vmem>>, %arg4: memref<1x256xf32, #tpu.memory_space<vmem>>, %arg5: memref<64x16xbf16, #tpu.memory_space<vmem>>, %arg6: memref<1x16xf32, #tpu.memory_space<vmem>>, %arg7: memref<8x64xf32, #tpu.memory_space<vmem>>) attributes {dimension_semantics = [], scalar_prefetch = 0 : i64, scratch_operands = 0 : i64, tpu.core_type = #tpu.core_type<tc>} {
    %c0 = arith.constant 0 : index
    %c0_0 = arith.constant 0 : index
    %0 = vector.load %arg0[%c0, %c0_0] : memref<64x32xbf16, #tpu.memory_space<vmem>>, vector<64x32xbf16>
    %c0_1 = arith.constant 0 : index
    %c0_2 = arith.constant 0 : index
    %1 = vector.load %arg2[%c0_1, %c0_2] : memref<32x256xbf16, #tpu.memory_space<vmem>>, vector<32x256xbf16>
    %cst = arith.constant dense<0.000000e+00> : vector<64x256xf32>
    %2 = tpu.matmul %0, %1, %cst {dimension_numbers = #tpu.dot_dimension_numbers<[1], [0], [0], [1], [0, 0, 1, 1], [], []>} : vector<64x32xbf16>, vector<32x256xbf16>, vector<64x256xf32> -> vector<64x256xf32>
    %c0_3 = arith.constant 0 : index
    %c0_4 = arith.constant 0 : index
    %3 = vector.load %arg4[%c0_3, %c0_4] : memref<1x256xf32, #tpu.memory_space<vmem>>, vector<1x256xf32>
    %4 = vector.broadcast %3 : vector<1x256xf32> to vector<64x256xf32>
    %5 = arith.addf %2, %4 : vector<64x256xf32>
    %c0_5 = arith.constant 0 : index
    %c0_6 = arith.constant 0 : index
    %6 = vector.load %arg3[%c0_5, %c0_6] : memref<64x256xbf16, #tpu.memory_space<vmem>>, vector<64x256xbf16>
    %c0_7 = arith.constant 0 : index
    %c0_8 = arith.constant 0 : index
    %7 = vector.load %arg1[%c0_7, %c0_8] : memref<64x64xf32, #tpu.memory_space<vmem>>, vector<64x64xf32>
    %cst_9 = arith.constant 5.000000e-01 : f32
    %8 = vector.broadcast %cst_9 : f32 to vector<64x64xf32>
    %9 = arith.cmpf ogt, %7, %8 : vector<64x64xf32>
    %cst_10 = arith.constant 0.000000e+00 : f32
    %10 = vector.broadcast %cst_10 : f32 to vector<8x64xf32>
    %cst_11 = arith.constant 0.000000e+00 : f32
    %11 = vector.broadcast %cst_11 : f32 to vector<8x64xf32>
    %cst_12 = arith.constant 0.000000e+00 : f32
    %12 = vector.broadcast %cst_12 : f32 to vector<8x64xf32>
    %13 = vector.extract_strided_slice %5 {offsets = [0, 0], sizes = [8, 256], strides = [1, 1]} : vector<64x256xf32> to vector<8x256xf32>
    %14 = arith.truncf %10 : vector<8x64xf32> to vector<8x64xbf16>
    %cst_13 = arith.constant dense<0.000000e+00> : vector<8x256xf32>
    %15 = tpu.matmul %14, %6, %cst_13 {dimension_numbers = #tpu.dot_dimension_numbers<[1], [0], [0], [1], [0, 0, 1, 1], [], []>} : vector<8x64xbf16>, vector<64x256xbf16>, vector<8x256xf32> -> vector<8x256xf32>
    %16 = arith.addf %13, %15 : vector<8x256xf32>
    %17 = vector.extract_strided_slice %16 {offsets = [0, 0], sizes = [8, 192], strides = [1, 1]} : vector<8x256xf32> to vector<8x192xf32>
    %18 = arith.negf %17 : vector<8x192xf32>
    %19 = math.exp %18 : vector<8x192xf32>
    %cst_14 = arith.constant 1.000000e+00 : f32
    %20 = vector.broadcast %cst_14 : f32 to vector<8x192xf32>
    %21 = arith.addf %20, %19 : vector<8x192xf32>
    %22 = arith.divf %20, %21 : vector<8x192xf32>
    %23 = vector.extract_strided_slice %16 {offsets = [0, 192], sizes = [8, 64], strides = [1, 1]} : vector<8x256xf32> to vector<8x64xf32>
    %24 = math.tanh %23 : vector<8x64xf32>
    %25 = vector.extract_strided_slice %22 {offsets = [0, 0], sizes = [8, 64], strides = [1, 1]} : vector<8x192xf32> to vector<8x64xf32>
    %26 = vector.extract_strided_slice %22 {offsets = [0, 64], sizes = [8, 64], strides = [1, 1]} : vector<8x192xf32> to vector<8x64xf32>
    %27 = vector.extract_strided_slice %22 {offsets = [0, 128], sizes = [8, 64], strides = [1, 1]} : vector<8x192xf32> to vector<8x64xf32>
    %28 = arith.mulf %26, %11 : vector<8x64xf32>
    %29 = arith.mulf %25, %24 : vector<8x64xf32>
    %30 = arith.addf %28, %29 : vector<8x64xf32>
    %31 = math.tanh %30 : vector<8x64xf32>
    %32 = arith.mulf %27, %31 : vector<8x64xf32>
    %33 = vector.extract_strided_slice %9 {offsets = [0, 0], sizes = [8, 64], strides = [1, 1]} : vector<64x64xi1> to vector<8x64xi1>
    %34 = arith.select %33, %32, %10 : vector<8x64xi1>, vector<8x64xf32>
    %35 = arith.select %33, %30, %11 : vector<8x64xi1>, vector<8x64xf32>
    %36 = arith.select %33, %32, %12 : vector<8x64xi1>, vector<8x64xf32>
    %37 = vector.extract_strided_slice %36 {offsets = [0, 0], sizes = [8, 32], strides = [1, 1]} : vector<8x64xf32> to vector<8x32xf32>
    %38 = vector.extract_strided_slice %36 {offsets = [0, 32], sizes = [8, 32], strides = [1, 1]} : vector<8x64xf32> to vector<8x32xf32>
    %39 = vector.extract_strided_slice %5 {offsets = [8, 0], sizes = [8, 256], strides = [1, 1]} : vector<64x256xf32> to vector<8x256xf32>
    %40 = arith.truncf %34 : vector<8x64xf32> to vector<8x64xbf16>
    %cst_15 = arith.constant dense<0.000000e+00> : vector<8x256xf32>
    %41 = tpu.matmul %40, %6, %cst_15 {dimension_numbers = #tpu.dot_dimension_numbers<[1], [0], [0], [1], [0, 0, 1, 1], [], []>} : vector<8x64xbf16>, vector<64x256xbf16>, vector<8x256xf32> -> vector<8x256xf32>
    %42 = arith.addf %39, %41 : vector<8x256xf32>
    %43 = vector.extract_strided_slice %42 {offsets = [0, 0], sizes = [8, 192], strides = [1, 1]} : vector<8x256xf32> to vector<8x192xf32>
    %44 = arith.negf %43 : vector<8x192xf32>
    %45 = math.exp %44 : vector<8x192xf32>
    %cst_16 = arith.constant 1.000000e+00 : f32
    %46 = vector.broadcast %cst_16 : f32 to vector<8x192xf32>
    %47 = arith.addf %46, %45 : vector<8x192xf32>
    %48 = arith.divf %46, %47 : vector<8x192xf32>
    %49 = vector.extract_strided_slice %42 {offsets = [0, 192], sizes = [8, 64], strides = [1, 1]} : vector<8x256xf32> to vector<8x64xf32>
    %50 = math.tanh %49 : vector<8x64xf32>
    %51 = vector.extract_strided_slice %48 {offsets = [0, 0], sizes = [8, 64], strides = [1, 1]} : vector<8x192xf32> to vector<8x64xf32>
    %52 = vector.extract_strided_slice %48 {offsets = [0, 64], sizes = [8, 64], strides = [1, 1]} : vector<8x192xf32> to vector<8x64xf32>
    %53 = vector.extract_strided_slice %48 {offsets = [0, 128], sizes = [8, 64], strides = [1, 1]} : vector<8x192xf32> to vector<8x64xf32>
    %54 = arith.mulf %52, %35 : vector<8x64xf32>
    %55 = arith.mulf %51, %50 : vector<8x64xf32>
    %56 = arith.addf %54, %55 : vector<8x64xf32>
    %57 = math.tanh %56 : vector<8x64xf32>
    %58 = arith.mulf %53, %57 : vector<8x64xf32>
    %59 = vector.extract_strided_slice %9 {offsets = [8, 0], sizes = [8, 64], strides = [1, 1]} : vector<64x64xi1> to vector<8x64xi1>
    %60 = arith.select %59, %58, %34 : vector<8x64xi1>, vector<8x64xf32>
    %61 = arith.select %59, %56, %35 : vector<8x64xi1>, vector<8x64xf32>
    %62 = arith.select %59, %58, %12 : vector<8x64xi1>, vector<8x64xf32>
    %63 = vector.extract_strided_slice %62 {offsets = [0, 0], sizes = [8, 32], strides = [1, 1]} : vector<8x64xf32> to vector<8x32xf32>
    %64 = vector.extract_strided_slice %62 {offsets = [0, 32], sizes = [8, 32], strides = [1, 1]} : vector<8x64xf32> to vector<8x32xf32>
    %65 = vector.extract_strided_slice %5 {offsets = [16, 0], sizes = [8, 256], strides = [1, 1]} : vector<64x256xf32> to vector<8x256xf32>
    %66 = arith.truncf %60 : vector<8x64xf32> to vector<8x64xbf16>
    %cst_17 = arith.constant dense<0.000000e+00> : vector<8x256xf32>
    %67 = tpu.matmul %66, %6, %cst_17 {dimension_numbers = #tpu.dot_dimension_numbers<[1], [0], [0], [1], [0, 0, 1, 1], [], []>} : vector<8x64xbf16>, vector<64x256xbf16>, vector<8x256xf32> -> vector<8x256xf32>
    %68 = arith.addf %65, %67 : vector<8x256xf32>
    %69 = vector.extract_strided_slice %68 {offsets = [0, 0], sizes = [8, 192], strides = [1, 1]} : vector<8x256xf32> to vector<8x192xf32>
    %70 = arith.negf %69 : vector<8x192xf32>
    %71 = math.exp %70 : vector<8x192xf32>
    %cst_18 = arith.constant 1.000000e+00 : f32
    %72 = vector.broadcast %cst_18 : f32 to vector<8x192xf32>
    %73 = arith.addf %72, %71 : vector<8x192xf32>
    %74 = arith.divf %72, %73 : vector<8x192xf32>
    %75 = vector.extract_strided_slice %68 {offsets = [0, 192], sizes = [8, 64], strides = [1, 1]} : vector<8x256xf32> to vector<8x64xf32>
    %76 = math.tanh %75 : vector<8x64xf32>
    %77 = vector.extract_strided_slice %74 {offsets = [0, 0], sizes = [8, 64], strides = [1, 1]} : vector<8x192xf32> to vector<8x64xf32>
    %78 = vector.extract_strided_slice %74 {offsets = [0, 64], sizes = [8, 64], strides = [1, 1]} : vector<8x192xf32> to vector<8x64xf32>
    %79 = vector.extract_strided_slice %74 {offsets = [0, 128], sizes = [8, 64], strides = [1, 1]} : vector<8x192xf32> to vector<8x64xf32>
    %80 = arith.mulf %78, %61 : vector<8x64xf32>
    %81 = arith.mulf %77, %76 : vector<8x64xf32>
    %82 = arith.addf %80, %81 : vector<8x64xf32>
    %83 = math.tanh %82 : vector<8x64xf32>
    %84 = arith.mulf %79, %83 : vector<8x64xf32>
    %85 = vector.extract_strided_slice %9 {offsets = [16, 0], sizes = [8, 64], strides = [1, 1]} : vector<64x64xi1> to vector<8x64xi1>
    %86 = arith.select %85, %84, %60 : vector<8x64xi1>, vector<8x64xf32>
    %87 = arith.select %85, %82, %61 : vector<8x64xi1>, vector<8x64xf32>
    %88 = arith.select %85, %84, %12 : vector<8x64xi1>, vector<8x64xf32>
    %89 = vector.extract_strided_slice %88 {offsets = [0, 0], sizes = [8, 32], strides = [1, 1]} : vector<8x64xf32> to vector<8x32xf32>
    %90 = vector.extract_strided_slice %88 {offsets = [0, 32], sizes = [8, 32], strides = [1, 1]} : vector<8x64xf32> to vector<8x32xf32>
    %91 = vector.extract_strided_slice %5 {offsets = [24, 0], sizes = [8, 256], strides = [1, 1]} : vector<64x256xf32> to vector<8x256xf32>
    %92 = arith.truncf %86 : vector<8x64xf32> to vector<8x64xbf16>
    %cst_19 = arith.constant dense<0.000000e+00> : vector<8x256xf32>
    %93 = tpu.matmul %92, %6, %cst_19 {dimension_numbers = #tpu.dot_dimension_numbers<[1], [0], [0], [1], [0, 0, 1, 1], [], []>} : vector<8x64xbf16>, vector<64x256xbf16>, vector<8x256xf32> -> vector<8x256xf32>
    %94 = arith.addf %91, %93 : vector<8x256xf32>
    %95 = vector.extract_strided_slice %94 {offsets = [0, 0], sizes = [8, 192], strides = [1, 1]} : vector<8x256xf32> to vector<8x192xf32>
    %96 = arith.negf %95 : vector<8x192xf32>
    %97 = math.exp %96 : vector<8x192xf32>
    %cst_20 = arith.constant 1.000000e+00 : f32
    %98 = vector.broadcast %cst_20 : f32 to vector<8x192xf32>
    %99 = arith.addf %98, %97 : vector<8x192xf32>
    %100 = arith.divf %98, %99 : vector<8x192xf32>
    %101 = vector.extract_strided_slice %94 {offsets = [0, 192], sizes = [8, 64], strides = [1, 1]} : vector<8x256xf32> to vector<8x64xf32>
    %102 = math.tanh %101 : vector<8x64xf32>
    %103 = vector.extract_strided_slice %100 {offsets = [0, 0], sizes = [8, 64], strides = [1, 1]} : vector<8x192xf32> to vector<8x64xf32>
    %104 = vector.extract_strided_slice %100 {offsets = [0, 64], sizes = [8, 64], strides = [1, 1]} : vector<8x192xf32> to vector<8x64xf32>
    %105 = vector.extract_strided_slice %100 {offsets = [0, 128], sizes = [8, 64], strides = [1, 1]} : vector<8x192xf32> to vector<8x64xf32>
    %106 = arith.mulf %104, %87 : vector<8x64xf32>
    %107 = arith.mulf %103, %102 : vector<8x64xf32>
    %108 = arith.addf %106, %107 : vector<8x64xf32>
    %109 = math.tanh %108 : vector<8x64xf32>
    %110 = arith.mulf %105, %109 : vector<8x64xf32>
    %111 = vector.extract_strided_slice %9 {offsets = [24, 0], sizes = [8, 64], strides = [1, 1]} : vector<64x64xi1> to vector<8x64xi1>
    %112 = arith.select %111, %110, %86 : vector<8x64xi1>, vector<8x64xf32>
    %113 = arith.select %111, %108, %87 : vector<8x64xi1>, vector<8x64xf32>
    %114 = arith.select %111, %110, %12 : vector<8x64xi1>, vector<8x64xf32>
    %115 = vector.extract_strided_slice %114 {offsets = [0, 0], sizes = [8, 32], strides = [1, 1]} : vector<8x64xf32> to vector<8x32xf32>
    %116 = vector.extract_strided_slice %114 {offsets = [0, 32], sizes = [8, 32], strides = [1, 1]} : vector<8x64xf32> to vector<8x32xf32>
    %117 = vector.extract_strided_slice %5 {offsets = [32, 0], sizes = [8, 256], strides = [1, 1]} : vector<64x256xf32> to vector<8x256xf32>
    %118 = arith.truncf %112 : vector<8x64xf32> to vector<8x64xbf16>
    %cst_21 = arith.constant dense<0.000000e+00> : vector<8x256xf32>
    %119 = tpu.matmul %118, %6, %cst_21 {dimension_numbers = #tpu.dot_dimension_numbers<[1], [0], [0], [1], [0, 0, 1, 1], [], []>} : vector<8x64xbf16>, vector<64x256xbf16>, vector<8x256xf32> -> vector<8x256xf32>
    %120 = arith.addf %117, %119 : vector<8x256xf32>
    %121 = vector.extract_strided_slice %120 {offsets = [0, 0], sizes = [8, 192], strides = [1, 1]} : vector<8x256xf32> to vector<8x192xf32>
    %122 = arith.negf %121 : vector<8x192xf32>
    %123 = math.exp %122 : vector<8x192xf32>
    %cst_22 = arith.constant 1.000000e+00 : f32
    %124 = vector.broadcast %cst_22 : f32 to vector<8x192xf32>
    %125 = arith.addf %124, %123 : vector<8x192xf32>
    %126 = arith.divf %124, %125 : vector<8x192xf32>
    %127 = vector.extract_strided_slice %120 {offsets = [0, 192], sizes = [8, 64], strides = [1, 1]} : vector<8x256xf32> to vector<8x64xf32>
    %128 = math.tanh %127 : vector<8x64xf32>
    %129 = vector.extract_strided_slice %126 {offsets = [0, 0], sizes = [8, 64], strides = [1, 1]} : vector<8x192xf32> to vector<8x64xf32>
    %130 = vector.extract_strided_slice %126 {offsets = [0, 64], sizes = [8, 64], strides = [1, 1]} : vector<8x192xf32> to vector<8x64xf32>
    %131 = vector.extract_strided_slice %126 {offsets = [0, 128], sizes = [8, 64], strides = [1, 1]} : vector<8x192xf32> to vector<8x64xf32>
    %132 = arith.mulf %130, %113 : vector<8x64xf32>
    %133 = arith.mulf %129, %128 : vector<8x64xf32>
    %134 = arith.addf %132, %133 : vector<8x64xf32>
    %135 = math.tanh %134 : vector<8x64xf32>
    %136 = arith.mulf %131, %135 : vector<8x64xf32>
    %137 = vector.extract_strided_slice %9 {offsets = [32, 0], sizes = [8, 64], strides = [1, 1]} : vector<64x64xi1> to vector<8x64xi1>
    %138 = arith.select %137, %136, %112 : vector<8x64xi1>, vector<8x64xf32>
    %139 = arith.select %137, %134, %113 : vector<8x64xi1>, vector<8x64xf32>
    %140 = arith.select %137, %136, %12 : vector<8x64xi1>, vector<8x64xf32>
    %141 = vector.extract_strided_slice %140 {offsets = [0, 0], sizes = [8, 32], strides = [1, 1]} : vector<8x64xf32> to vector<8x32xf32>
    %142 = vector.extract_strided_slice %140 {offsets = [0, 32], sizes = [8, 32], strides = [1, 1]} : vector<8x64xf32> to vector<8x32xf32>
    %143 = vector.extract_strided_slice %5 {offsets = [40, 0], sizes = [8, 256], strides = [1, 1]} : vector<64x256xf32> to vector<8x256xf32>
    %144 = arith.truncf %138 : vector<8x64xf32> to vector<8x64xbf16>
    %cst_23 = arith.constant dense<0.000000e+00> : vector<8x256xf32>
    %145 = tpu.matmul %144, %6, %cst_23 {dimension_numbers = #tpu.dot_dimension_numbers<[1], [0], [0], [1], [0, 0, 1, 1], [], []>} : vector<8x64xbf16>, vector<64x256xbf16>, vector<8x256xf32> -> vector<8x256xf32>
    %146 = arith.addf %143, %145 : vector<8x256xf32>
    %147 = vector.extract_strided_slice %146 {offsets = [0, 0], sizes = [8, 192], strides = [1, 1]} : vector<8x256xf32> to vector<8x192xf32>
    %148 = arith.negf %147 : vector<8x192xf32>
    %149 = math.exp %148 : vector<8x192xf32>
    %cst_24 = arith.constant 1.000000e+00 : f32
    %150 = vector.broadcast %cst_24 : f32 to vector<8x192xf32>
    %151 = arith.addf %150, %149 : vector<8x192xf32>
    %152 = arith.divf %150, %151 : vector<8x192xf32>
    %153 = vector.extract_strided_slice %146 {offsets = [0, 192], sizes = [8, 64], strides = [1, 1]} : vector<8x256xf32> to vector<8x64xf32>
    %154 = math.tanh %153 : vector<8x64xf32>
    %155 = vector.extract_strided_slice %152 {offsets = [0, 0], sizes = [8, 64], strides = [1, 1]} : vector<8x192xf32> to vector<8x64xf32>
    %156 = vector.extract_strided_slice %152 {offsets = [0, 64], sizes = [8, 64], strides = [1, 1]} : vector<8x192xf32> to vector<8x64xf32>
    %157 = vector.extract_strided_slice %152 {offsets = [0, 128], sizes = [8, 64], strides = [1, 1]} : vector<8x192xf32> to vector<8x64xf32>
    %158 = arith.mulf %156, %139 : vector<8x64xf32>
    %159 = arith.mulf %155, %154 : vector<8x64xf32>
    %160 = arith.addf %158, %159 : vector<8x64xf32>
    %161 = math.tanh %160 : vector<8x64xf32>
    %162 = arith.mulf %157, %161 : vector<8x64xf32>
    %163 = vector.extract_strided_slice %9 {offsets = [40, 0], sizes = [8, 64], strides = [1, 1]} : vector<64x64xi1> to vector<8x64xi1>
    %164 = arith.select %163, %162, %138 : vector<8x64xi1>, vector<8x64xf32>
    %165 = arith.select %163, %160, %139 : vector<8x64xi1>, vector<8x64xf32>
    %166 = arith.select %163, %162, %12 : vector<8x64xi1>, vector<8x64xf32>
    %167 = vector.extract_strided_slice %166 {offsets = [0, 0], sizes = [8, 32], strides = [1, 1]} : vector<8x64xf32> to vector<8x32xf32>
    %168 = vector.extract_strided_slice %166 {offsets = [0, 32], sizes = [8, 32], strides = [1, 1]} : vector<8x64xf32> to vector<8x32xf32>
    %169 = vector.extract_strided_slice %5 {offsets = [48, 0], sizes = [8, 256], strides = [1, 1]} : vector<64x256xf32> to vector<8x256xf32>
    %170 = arith.truncf %164 : vector<8x64xf32> to vector<8x64xbf16>
    %cst_25 = arith.constant dense<0.000000e+00> : vector<8x256xf32>
    %171 = tpu.matmul %170, %6, %cst_25 {dimension_numbers = #tpu.dot_dimension_numbers<[1], [0], [0], [1], [0, 0, 1, 1], [], []>} : vector<8x64xbf16>, vector<64x256xbf16>, vector<8x256xf32> -> vector<8x256xf32>
    %172 = arith.addf %169, %171 : vector<8x256xf32>
    %173 = vector.extract_strided_slice %172 {offsets = [0, 0], sizes = [8, 192], strides = [1, 1]} : vector<8x256xf32> to vector<8x192xf32>
    %174 = arith.negf %173 : vector<8x192xf32>
    %175 = math.exp %174 : vector<8x192xf32>
    %cst_26 = arith.constant 1.000000e+00 : f32
    %176 = vector.broadcast %cst_26 : f32 to vector<8x192xf32>
    %177 = arith.addf %176, %175 : vector<8x192xf32>
    %178 = arith.divf %176, %177 : vector<8x192xf32>
    %179 = vector.extract_strided_slice %172 {offsets = [0, 192], sizes = [8, 64], strides = [1, 1]} : vector<8x256xf32> to vector<8x64xf32>
    %180 = math.tanh %179 : vector<8x64xf32>
    %181 = vector.extract_strided_slice %178 {offsets = [0, 0], sizes = [8, 64], strides = [1, 1]} : vector<8x192xf32> to vector<8x64xf32>
    %182 = vector.extract_strided_slice %178 {offsets = [0, 64], sizes = [8, 64], strides = [1, 1]} : vector<8x192xf32> to vector<8x64xf32>
    %183 = vector.extract_strided_slice %178 {offsets = [0, 128], sizes = [8, 64], strides = [1, 1]} : vector<8x192xf32> to vector<8x64xf32>
    %184 = arith.mulf %182, %165 : vector<8x64xf32>
    %185 = arith.mulf %181, %180 : vector<8x64xf32>
    %186 = arith.addf %184, %185 : vector<8x64xf32>
    %187 = math.tanh %186 : vector<8x64xf32>
    %188 = arith.mulf %183, %187 : vector<8x64xf32>
    %189 = vector.extract_strided_slice %9 {offsets = [48, 0], sizes = [8, 64], strides = [1, 1]} : vector<64x64xi1> to vector<8x64xi1>
    %190 = arith.select %189, %188, %164 : vector<8x64xi1>, vector<8x64xf32>
    %191 = arith.select %189, %186, %165 : vector<8x64xi1>, vector<8x64xf32>
    %192 = arith.select %189, %188, %12 : vector<8x64xi1>, vector<8x64xf32>
    %193 = vector.extract_strided_slice %192 {offsets = [0, 0], sizes = [8, 32], strides = [1, 1]} : vector<8x64xf32> to vector<8x32xf32>
    %194 = vector.extract_strided_slice %192 {offsets = [0, 32], sizes = [8, 32], strides = [1, 1]} : vector<8x64xf32> to vector<8x32xf32>
    %195 = vector.extract_strided_slice %5 {offsets = [56, 0], sizes = [8, 256], strides = [1, 1]} : vector<64x256xf32> to vector<8x256xf32>
    %196 = arith.truncf %190 : vector<8x64xf32> to vector<8x64xbf16>
    %cst_27 = arith.constant dense<0.000000e+00> : vector<8x256xf32>
    %197 = tpu.matmul %196, %6, %cst_27 {dimension_numbers = #tpu.dot_dimension_numbers<[1], [0], [0], [1], [0, 0, 1, 1], [], []>} : vector<8x64xbf16>, vector<64x256xbf16>, vector<8x256xf32> -> vector<8x256xf32>
    %198 = arith.addf %195, %197 : vector<8x256xf32>
    %199 = vector.extract_strided_slice %198 {offsets = [0, 0], sizes = [8, 192], strides = [1, 1]} : vector<8x256xf32> to vector<8x192xf32>
    %200 = arith.negf %199 : vector<8x192xf32>
    %201 = math.exp %200 : vector<8x192xf32>
    %cst_28 = arith.constant 1.000000e+00 : f32
    %202 = vector.broadcast %cst_28 : f32 to vector<8x192xf32>
    %203 = arith.addf %202, %201 : vector<8x192xf32>
    %204 = arith.divf %202, %203 : vector<8x192xf32>
    %205 = vector.extract_strided_slice %198 {offsets = [0, 192], sizes = [8, 64], strides = [1, 1]} : vector<8x256xf32> to vector<8x64xf32>
    %206 = math.tanh %205 : vector<8x64xf32>
    %207 = vector.extract_strided_slice %204 {offsets = [0, 0], sizes = [8, 64], strides = [1, 1]} : vector<8x192xf32> to vector<8x64xf32>
    %208 = vector.extract_strided_slice %204 {offsets = [0, 64], sizes = [8, 64], strides = [1, 1]} : vector<8x192xf32> to vector<8x64xf32>
    %209 = vector.extract_strided_slice %204 {offsets = [0, 128], sizes = [8, 64], strides = [1, 1]} : vector<8x192xf32> to vector<8x64xf32>
    %210 = arith.mulf %208, %191 : vector<8x64xf32>
    %211 = arith.mulf %207, %206 : vector<8x64xf32>
    %212 = arith.addf %210, %211 : vector<8x64xf32>
    %213 = math.tanh %212 : vector<8x64xf32>
    %214 = arith.mulf %209, %213 : vector<8x64xf32>
    %215 = vector.extract_strided_slice %9 {offsets = [56, 0], sizes = [8, 64], strides = [1, 1]} : vector<64x64xi1> to vector<8x64xi1>
    %216 = arith.select %215, %214, %12 : vector<8x64xi1>, vector<8x64xf32>
    %217 = vector.extract_strided_slice %216 {offsets = [0, 0], sizes = [8, 32], strides = [1, 1]} : vector<8x64xf32> to vector<8x32xf32>
    %218 = vector.extract_strided_slice %216 {offsets = [0, 32], sizes = [8, 32], strides = [1, 1]} : vector<8x64xf32> to vector<8x32xf32>
    %219 = tpu.concatenate %37, %218 in 1 : vector<8x32xf32>, vector<8x32xf32> -> vector<8x64xf32>
    %220 = tpu.concatenate %63, %194 in 1 : vector<8x32xf32>, vector<8x32xf32> -> vector<8x64xf32>
    %221 = tpu.concatenate %89, %168 in 1 : vector<8x32xf32>, vector<8x32xf32> -> vector<8x64xf32>
    %222 = tpu.concatenate %115, %142 in 1 : vector<8x32xf32>, vector<8x32xf32> -> vector<8x64xf32>
    %223 = tpu.concatenate %141, %116 in 1 : vector<8x32xf32>, vector<8x32xf32> -> vector<8x64xf32>
    %224 = tpu.concatenate %167, %90 in 1 : vector<8x32xf32>, vector<8x32xf32> -> vector<8x64xf32>
    %225 = tpu.concatenate %193, %64 in 1 : vector<8x32xf32>, vector<8x32xf32> -> vector<8x64xf32>
    %226 = tpu.concatenate %217, %38 in 1 : vector<8x32xf32>, vector<8x32xf32> -> vector<8x64xf32>
    %227 = tpu.concatenate %219, %220, %221, %222, %223, %224, %225, %226 in 0 : vector<8x64xf32>, vector<8x64xf32>, vector<8x64xf32>, vector<8x64xf32>, vector<8x64xf32>, vector<8x64xf32>, vector<8x64xf32>, vector<8x64xf32> -> vector<64x64xf32>
    %228 = arith.truncf %227 : vector<64x64xf32> to vector<64x64xbf16>
    %c0_29 = arith.constant 0 : index
    %c0_30 = arith.constant 0 : index
    %229 = vector.load %arg5[%c0_29, %c0_30] : memref<64x16xbf16, #tpu.memory_space<vmem>>, vector<64x16xbf16>
    %cst_31 = arith.constant dense<0.000000e+00> : vector<64x16xf32>
    %230 = tpu.matmul %228, %229, %cst_31 {dimension_numbers = #tpu.dot_dimension_numbers<[1], [0], [0], [1], [0, 0, 1, 1], [], []>} : vector<64x64xbf16>, vector<64x16xbf16>, vector<64x16xf32> -> vector<64x16xf32>
    %231 = math.tanh %230 : vector<64x16xf32>
    %c0_32 = arith.constant 0 : index
    %c0_33 = arith.constant 0 : index
    %232 = vector.load %arg6[%c0_32, %c0_33] : memref<1x16xf32, #tpu.memory_space<vmem>>, vector<1x16xf32>
    %233 = vector.broadcast %232 : vector<1x16xf32> to vector<64x16xf32>
    %234 = arith.mulf %231, %233 : vector<64x16xf32>
    %cst_34 = arith.constant dense<0.000000e+00> : vector<64xf32>
    %235 = vector.multi_reduction <add>, %234, %cst_34 [1] : vector<64x16xf32> to vector<64xf32>
    %236 = vector.shape_cast %235 : vector<64xf32> to vector<64x1xf32>
    %237 = vector.extract_strided_slice %236 {offsets = [0, 0], sizes = [8, 1], strides = [1, 1]} : vector<64x1xf32> to vector<8x1xf32>
    %238 = vector.extract_strided_slice %236 {offsets = [8, 0], sizes = [8, 1], strides = [1, 1]} : vector<64x1xf32> to vector<8x1xf32>
    %239 = vector.extract_strided_slice %236 {offsets = [16, 0], sizes = [8, 1], strides = [1, 1]} : vector<64x1xf32> to vector<8x1xf32>
    %240 = vector.extract_strided_slice %236 {offsets = [24, 0], sizes = [8, 1], strides = [1, 1]} : vector<64x1xf32> to vector<8x1xf32>
    %241 = vector.extract_strided_slice %236 {offsets = [32, 0], sizes = [8, 1], strides = [1, 1]} : vector<64x1xf32> to vector<8x1xf32>
    %242 = vector.extract_strided_slice %236 {offsets = [40, 0], sizes = [8, 1], strides = [1, 1]} : vector<64x1xf32> to vector<8x1xf32>
    %243 = vector.extract_strided_slice %236 {offsets = [48, 0], sizes = [8, 1], strides = [1, 1]} : vector<64x1xf32> to vector<8x1xf32>
    %244 = vector.extract_strided_slice %236 {offsets = [56, 0], sizes = [8, 1], strides = [1, 1]} : vector<64x1xf32> to vector<8x1xf32>
    %245 = arith.maximumf %237, %238 : vector<8x1xf32>
    %246 = arith.maximumf %245, %239 : vector<8x1xf32>
    %247 = arith.maximumf %246, %240 : vector<8x1xf32>
    %248 = arith.maximumf %247, %241 : vector<8x1xf32>
    %249 = arith.maximumf %248, %242 : vector<8x1xf32>
    %250 = arith.maximumf %249, %243 : vector<8x1xf32>
    %251 = arith.maximumf %250, %244 : vector<8x1xf32>
    %252 = arith.subf %237, %251 : vector<8x1xf32>
    %253 = math.exp %252 : vector<8x1xf32>
    %254 = arith.subf %238, %251 : vector<8x1xf32>
    %255 = math.exp %254 : vector<8x1xf32>
    %256 = arith.subf %239, %251 : vector<8x1xf32>
    %257 = math.exp %256 : vector<8x1xf32>
    %258 = arith.subf %240, %251 : vector<8x1xf32>
    %259 = math.exp %258 : vector<8x1xf32>
    %260 = arith.subf %241, %251 : vector<8x1xf32>
    %261 = math.exp %260 : vector<8x1xf32>
    %262 = arith.subf %242, %251 : vector<8x1xf32>
    %263 = math.exp %262 : vector<8x1xf32>
    %264 = arith.subf %243, %251 : vector<8x1xf32>
    %265 = math.exp %264 : vector<8x1xf32>
    %266 = arith.subf %244, %251 : vector<8x1xf32>
    %267 = math.exp %266 : vector<8x1xf32>
    %268 = arith.addf %253, %255 : vector<8x1xf32>
    %269 = arith.addf %268, %257 : vector<8x1xf32>
    %270 = arith.addf %269, %259 : vector<8x1xf32>
    %271 = arith.addf %270, %261 : vector<8x1xf32>
    %272 = arith.addf %271, %263 : vector<8x1xf32>
    %273 = arith.addf %272, %265 : vector<8x1xf32>
    %274 = arith.addf %273, %267 : vector<8x1xf32>
    %275 = vector.broadcast %253 : vector<8x1xf32> to vector<8x64xf32>
    %276 = arith.mulf %275, %219 : vector<8x64xf32>
    %277 = vector.broadcast %255 : vector<8x1xf32> to vector<8x64xf32>
    %278 = arith.mulf %277, %220 : vector<8x64xf32>
    %279 = vector.broadcast %257 : vector<8x1xf32> to vector<8x64xf32>
    %280 = arith.mulf %279, %221 : vector<8x64xf32>
    %281 = vector.broadcast %259 : vector<8x1xf32> to vector<8x64xf32>
    %282 = arith.mulf %281, %222 : vector<8x64xf32>
    %283 = vector.broadcast %261 : vector<8x1xf32> to vector<8x64xf32>
    %284 = arith.mulf %283, %223 : vector<8x64xf32>
    %285 = vector.broadcast %263 : vector<8x1xf32> to vector<8x64xf32>
    %286 = arith.mulf %285, %224 : vector<8x64xf32>
    %287 = vector.broadcast %265 : vector<8x1xf32> to vector<8x64xf32>
    %288 = arith.mulf %287, %225 : vector<8x64xf32>
    %289 = vector.broadcast %267 : vector<8x1xf32> to vector<8x64xf32>
    %290 = arith.mulf %289, %226 : vector<8x64xf32>
    %291 = arith.addf %276, %278 : vector<8x64xf32>
    %292 = arith.addf %291, %280 : vector<8x64xf32>
    %293 = arith.addf %292, %282 : vector<8x64xf32>
    %294 = arith.addf %293, %284 : vector<8x64xf32>
    %295 = arith.addf %294, %286 : vector<8x64xf32>
    %296 = arith.addf %295, %288 : vector<8x64xf32>
    %297 = arith.addf %296, %290 : vector<8x64xf32>
    %298 = tpu.reciprocal %274 {approx = true} : vector<8x1xf32> -> vector<8x1xf32>
    %299 = vector.broadcast %298 : vector<8x1xf32> to vector<8x64xf32>
    %300 = arith.mulf %297, %299 : vector<8x64xf32>
    %c0_35 = arith.constant 0 : index
    %c0_36 = arith.constant 0 : index
    %301 = vector.load %arg7[%c0_35, %c0_36] : memref<8x64xf32, #tpu.memory_space<vmem>>, vector<8x64xf32>
    tpu.vector_store %arg7[%c0_35, %c0_36], %300 {strides = array<i32>} : memref<8x64xf32, #tpu.memory_space<vmem>>, vector<8x64xf32>,
    return
  }
}

</mosaic_0001>

<llo_original>
// kernel: tpu_custom_call.1
$region0: #{tpu_custom_call.1}
  #allocation0 [shape = 'u32[]', space=smem, size = 0x4, offset = 0x4, fixed_abs, tag = 'smem constant byte address 0x4 - core index']
  #allocation1 [shape = 'u32[72,128]{1,0:T(1,128)}', space=vmem, size = 0x9000, scoped, tag = 'internal scratch']
  %s0 = inlined_call_operand.vmem [shape: bf16[64,32], index: 0, kind: input, shape index: {}]
  %s1 = inlined_call_operand.vmem [shape: f32[64,64], index: 1, kind: input, shape index: {}]
  %s2 = inlined_call_operand.hbm [shape: bf16[32,256], index: 2, kind: input, shape index: {}]
  %s3 = inlined_call_operand.hbm [shape: bf16[64,256], index: 3, kind: input, shape index: {}]
  %s4 = inlined_call_operand.vmem [shape: f32[1,256], index: 4, kind: input, shape index: {}]
  %s5 = inlined_call_operand.vmem [shape: bf16[64,16], index: 5, kind: input, shape index: {}]
  %s6 = inlined_call_operand.vmem [shape: f32[1,16], index: 6, kind: input, shape index: {}]
  %s7 = inlined_call_operand.hbm [shape: f32[8,64], index: 7, kind: output, shape index: {}]
  %s8 = sld [smem:[#allocation0]]
  $region46: #{tpu_custom_call.1} parent=0
    _
  %s10 = ssub.s32 1, %s8
  %s11 = scalar_select 0, %s10, %s8
  $region1: #{tpu_custom_call.1} parent=0
    #allocation2 [shape = 'u8[16384]{0}', space=vmem, size = 0x4000, scoped, tag = 'input window, operand 2, single buffered']
    #allocation3 [shape = 's32[1]{0}', space=sflag, size = 0x4, scoped, tag = 'scoped memory for tpu_custom_call.1']
    #allocation4 [shape = 's32[1]{0}', space=sflag, size = 0x4, scoped, tag = 'scoped memory for tpu_custom_call.1']
    #allocation5 [shape = 'u8[32768]{0}', space=vmem, size = 0x8000, scoped, tag = 'input window, operand 3, single buffered']
    #allocation6 [shape = 's32[1]{0}', space=sflag, size = 0x4, scoped, tag = 'scoped memory for tpu_custom_call.1']
    #allocation7 [shape = 'u8[4096]{0}', space=vmem, size = 0x1000, scoped, tag = 'output window, operand 0, single buffered']
    %12 = vsyncpa [#allocation3], 0
    %13 = vsyncpa [#allocation6], 0
    %14 = vsyncpa [#allocation4], 0
    // Predicated region
    $region2: #{tpu_custom_call.1} parent=1 // pred_check
      _
    $region3: #{tpu_custom_call.1} parent=1 // pred_check_branch
      %16 = sbr.rel (0) target = $region5
    $region4: #{tpu_custom_call.1} parent=1 // pred_region
      _
    $region5: #{tpu_custom_call.1} parent=1 // pred_fallthru
      _
    // Predicated region
    $region6: #{tpu_custom_call.1} parent=1 // pred_check
      _
    $region7: #{tpu_custom_call.1} parent=1 // pred_check_branch
      %18 = sbr.rel (0) target = $region9
    $region8: #{tpu_custom_call.1} parent=1 // pred_region
      _
    $region9: #{tpu_custom_call.1} parent=1 // pred_fallthru
      _
    // Predicated region
    $region10: #{tpu_custom_call.1} parent=1 // pred_check
      _
    $region11: #{tpu_custom_call.1} parent=1 // pred_check_branch
      %20 = sbr.rel (0) target = $region13
    $region12: #{tpu_custom_call.1} parent=1 // pred_region
      %22 = vsyncadd [#allocation3], 0
      %s23 = sshll.u32 %s2, 4
      %s24 = int_to_ptr.hbm [resolvable:$true] %s23
      %s25 = sshll.u32 [#allocation2], 4
      %s26 = int_to_ptr.vmem [resolvable:$true] %s25
      %31 = dma.hbm_to_vmem [thread:$0]  %s24, 512, %s26, [#allocation3], 128, 128, 8
    $region13: #{tpu_custom_call.1} parent=1 // pred_fallthru
      _
    // Predicated region
    $region14: #{tpu_custom_call.1} parent=1 // pred_check
      _
    $region15: #{tpu_custom_call.1} parent=1 // pred_check_branch
      %33 = sbr.rel (0) target = $region17
    $region16: #{tpu_custom_call.1} parent=1 // pred_region
      %35 = vsyncadd [#allocation6], 0
      %s36 = sshll.u32 %s3, 4
      %s37 = int_to_ptr.hbm [resolvable:$true] %s36
      %s38 = sshll.u32 [#allocation5], 4
      %s39 = int_to_ptr.vmem [resolvable:$true] %s38
      %44 = dma.hbm_to_vmem [thread:$0]  %s37, 1024, %s39, [#allocation6], 128, 128, 8
    $region17: #{tpu_custom_call.1} parent=1 // pred_fallthru
      _
    // Predicated region
    $region18: #{tpu_custom_call.1} parent=1 // pred_check
      _
    $region19: #{tpu_custom_call.1} parent=1 // pred_check_branch
      %46 = sbr.rel (0) target = $region21
    $region20: #{tpu_custom_call.1} parent=1 // pred_region
      _
    $region21: #{tpu_custom_call.1} parent=1 // pred_fallthru
      _
    // Predicated region
    $region22: #{tpu_custom_call.1} parent=1 // pred_check
      _
    $region23: #{tpu_custom_call.1} parent=1 // pred_check_branch
      %48 = sbr.rel (0) target = $region25
    $region24: #{tpu_custom_call.1} parent=1 // pred_region
      _
    $region25: #{tpu_custom_call.1} parent=1 // pred_fallthru
      _
    // Predicated region
    $region26: #{tpu_custom_call.1} parent=1 // pred_check
      _
    $region27: #{tpu_custom_call.1} parent=1 // pred_check_branch
      %50 = sbr.rel (0) target = $region29
    $region28: #{tpu_custom_call.1} parent=1 // pred_region
      _
    $region29: #{tpu_custom_call.1} parent=1 // pred_fallthru
      _
    // Predicated region
    $region30: #{tpu_custom_call.1} parent=1 // pred_check
      _
    $region31: #{tpu_custom_call.1} parent=1 // pred_check_branch
      %52 = sbr.rel (0) target = $region33
    $region32: #{tpu_custom_call.1} parent=1 // pred_region
      %54 = dma.done [#allocation3], 512
    $region33: #{tpu_custom_call.1} parent=1 // pred_fallthru
      _
    // Predicated region
    $region34: #{tpu_custom_call.1} parent=1 // pred_check
      _
    $region35: #{tpu_custom_call.1} parent=1 // pred_check_branch
      %56 = sbr.rel (0) target = $region37
    $region36: #{tpu_custom_call.1} parent=1 // pred_region
      %58 = dma.done [#allocation6], 1024
    $region37: #{tpu_custom_call.1} parent=1 // pred_fallthru
      _
    %v60 = vld [vmem:[%s0] sm:$0xf]
    %v61 = vld [vmem:[%s0 + $0x4] sm:$0xf]
    %v62 = vld [vmem:[%s0 + $0x8] sm:$0xf]
    %v63 = vld [vmem:[%s0 + $0xc] sm:$0xf]
    %v64 = vld [vmem:[%s0 + $0x10] sm:$0xf]
    %v65 = vld [vmem:[%s0 + $0x14] sm:$0xf]
    %v66 = vld [vmem:[%s0 + $0x18] sm:$0xf]
    %v67 = vld [vmem:[%s0 + $0x1c] sm:$0xf]
    %v68 = vld [vmem:[#allocation2] sm:$0xff]
    %v69 = vld [vmem:[#allocation2 + $0x8] sm:$0xff]
    %v70 = vld [vmem:[#allocation2 + $0x10] sm:$0xff]
    %v71 = vld [vmem:[#allocation2 + $0x18] sm:$0xff]
    %v72 = vld [vmem:[%s4] sm:$0x3]
    %v74 = vperm.slane %v72, 0
    %v75 = vperm.slane %v72, 1
    %v86 = vunpack.c.l.b16 %v60
    %v87 = vunpack.c.l.b16 %v61
    %v88 = vunpack.c.l.b16 %v62
    %v89 = vunpack.c.l.b16 %v63
    %v90 = vunpack.c.l.b16 %v64
    %v91 = vunpack.c.l.b16 %v65
    %v92 = vunpack.c.l.b16 %v66
    %v93 = vunpack.c.l.b16 %v67
    %v94 = vpack.c.b16 %v87, %v86
    %v95 = vpack.c.b16 %v89, %v88
    %v96 = vpack.c.b16 %v91, %v90
    %v97 = vpack.c.b16 %v93, %v92
    %v102 = vunpack.c.l.b16 %v68
    %v103 = vunpack.c.h.b16 %v68
    %v104 = vunpack.c.l.b16 %v69
    %v105 = vunpack.c.h.b16 %v69
    %v106 = vunpack.c.l.b16 %v70
    %v107 = vunpack.c.h.b16 %v70
    %v108 = vunpack.c.l.b16 %v71
    %v109 = vunpack.c.h.b16 %v71
    %v110 = vpack.c.b16 %v104, %v102
    %v111 = vpack.c.b16 %v105, %v103
    %v112 = vpack.c.b16 %v108, %v106
    %v113 = vpack.c.b16 %v109, %v107
    %vm118 = vcmask 261120
    %v120 = vsel %vm118, %v94, 0
    %v123 = vsel %vm118, %v95, 0
    %v126 = vsel %vm118, %v96, 0
    %v129 = vsel %vm118, %v97, 0
    %131 = vmatpush.bf16.msra.mxu0 0
    %132 = vmatpush.bf16.msra.mxu0 0
    %133 = vmatpush.bf16.msra.mxu0 0
    %134 = vmatpush.bf16.msra.mxu0 0
    %135 = vmatpush.bf16.msra.mxu0 0
    %136 = vmatpush.bf16.msra.mxu0 0
    %137 = vmatpush.bf16.msra.mxu0 %v112
    %138 = vmatpush.bf16.msra.mxu0 %v110
    %139 = vmatmul.bf16.gmra.mxu0 %v120
    %v140 = vpop.f32.mrf.mxu0
    %v141 = vadd.f32 %v74, %v140
    %v142 = vpop.f32.mrf.mxu0
    %v143 = vadd.f32 %v74, %v142
    %144 = vmatmul.bf16.gmra.mxu0 %v123
    %v145 = vpop.f32.mrf.mxu0
    %v146 = vadd.f32 %v74, %v145
    %v147 = vpop.f32.mrf.mxu0
    %v148 = vadd.f32 %v74, %v147
    %149 = vmatmul.bf16.gmra.mxu0 %v126
    %v150 = vpop.f32.mrf.mxu0
    %v151 = vadd.f32 %v74, %v150
    %v152 = vpop.f32.mrf.mxu0
    %v153 = vadd.f32 %v74, %v152
    %154 = vmatmul.bf16.gmra.mxu0 %v129
    %v155 = vpop.f32.mrf.mxu0
    %v156 = vadd.f32 %v74, %v155
    %v157 = vpop.f32.mrf.mxu0
    %v158 = vadd.f32 %v74, %v157
    %159 = vdwg.mxu0
    %160 = vmatpush.bf16.msra.mxu0 0
    %161 = vmatpush.bf16.msra.mxu0 0
    %162 = vmatpush.bf16.msra.mxu0 0
    %163 = vmatpush.bf16.msra.mxu0 0
    %164 = vmatpush.bf16.msra.mxu0 0
    %165 = vmatpush.bf16.msra.mxu0 0
    %166 = vmatpush.bf16.msra.mxu0 %v113
    %167 = vmatpush.bf16.msra.mxu0 %v111
    %168 = vmatmul.bf16.gmra.mxu0 %v120
    %v169 = vpop.f32.mrf.mxu0
    %v170 = vadd.f32 %v75, %v169
    %v171 = vpop.f32.mrf.mxu0
    %v172 = vadd.f32 %v75, %v171
    %173 = vmatmul.bf16.gmra.mxu0 %v123
    %v174 = vpop.f32.mrf.mxu0
    %v175 = vadd.f32 %v75, %v174
    %v176 = vpop.f32.mrf.mxu0
    %v177 = vadd.f32 %v75, %v176
    %178 = vmatmul.bf16.gmra.mxu0 %v126
    %v179 = vpop.f32.mrf.mxu0
    %v180 = vadd.f32 %v75, %v179
    %v181 = vpop.f32.mrf.mxu0
    %v182 = vadd.f32 %v75, %v181
    %183 = vmatmul.bf16.gmra.mxu0 %v129
    %v184 = vpop.f32.mrf.mxu0
    %v185 = vadd.f32 %v75, %v184
    %v186 = vpop.f32.mrf.mxu0
    %v187 = vadd.f32 %v75, %v186
    %188 = vdwg.mxu0
    %v189 = vld [vmem:[#allocation5] sm:$0xff]
    %v190 = vld [vmem:[#allocation5 + $0x8] sm:$0xff]
    %v191 = vld [vmem:[#allocation5 + $0x10] sm:$0xff]
    %v192 = vld [vmem:[#allocation5 + $0x18] sm:$0xff]
    %v193 = vld [vmem:[#allocation5 + $0x20] sm:$0xff]
    %v194 = vld [vmem:[#allocation5 + $0x28] sm:$0xff]
    %v195 = vld [vmem:[#allocation5 + $0x30] sm:$0xff]
    %v196 = vld [vmem:[#allocation5 + $0x38] sm:$0xff]
    %v197 = vld [vmem:[%s1] sm:$0xff]
    %v198 = vld [vmem:[%s1 + $0x8] sm:$0xff]
    %v199 = vld [vmem:[%s1 + $0x10] sm:$0xff]
    %v200 = vld [vmem:[%s1 + $0x18] sm:$0xff]
    %v201 = vld [vmem:[%s1 + $0x20] sm:$0xff]
    %v202 = vld [vmem:[%s1 + $0x28] sm:$0xff]
    %v203 = vld [vmem:[%s1 + $0x30] sm:$0xff]
    %v204 = vld [vmem:[%s1 + $0x38] sm:$0xff]
    %vm205 = vcmp.gt.f32.partialorder %v197, 0.5
    %vm206 = vcmp.gt.f32.partialorder %v198, 0.5
    %vm207 = vcmp.gt.f32.partialorder %v199, 0.5
    %vm208 = vcmp.gt.f32.partialorder %v200, 0.5
    %vm209 = vcmp.gt.f32.partialorder %v201, 0.5
    %vm210 = vcmp.gt.f32.partialorder %v202, 0.5
    %vm211 = vcmp.gt.f32.partialorder %v203, 0.5
    %vm212 = vcmp.gt.f32.partialorder %v204, 0.5
    %v221 = vunpack.c.l.b16 %v189
    %v222 = vunpack.c.h.b16 %v189
    %v223 = vunpack.c.l.b16 %v190
    %v224 = vunpack.c.h.b16 %v190
    %v225 = vunpack.c.l.b16 %v191
    %v226 = vunpack.c.h.b16 %v191
    %v227 = vunpack.c.l.b16 %v192
    %v228 = vunpack.c.h.b16 %v192
    %v229 = vunpack.c.l.b16 %v193
    %v230 = vunpack.c.h.b16 %v193
    %v231 = vunpack.c.l.b16 %v194
    %v232 = vunpack.c.h.b16 %v194
    %v233 = vunpack.c.l.b16 %v195
    %v234 = vunpack.c.h.b16 %v195
    %v235 = vunpack.c.l.b16 %v196
    %v236 = vunpack.c.h.b16 %v196
    %v237 = vpack.c.b16 %v223, %v221
    %v238 = vpack.c.b16 %v224, %v222
    %v239 = vpack.c.b16 %v227, %v225
    %v240 = vpack.c.b16 %v228, %v226
    %v241 = vpack.c.b16 %v231, %v229
    %v242 = vpack.c.b16 %v232, %v230
    %v243 = vpack.c.b16 %v235, %v233
    %v244 = vpack.c.b16 %v236, %v234
    %vm253 = vcmask 523264
    %v255 = vsel %vm253, 0, 0
    %257 = vmatpush.bf16.msra.mxu0 0
    %258 = vmatpush.bf16.msra.mxu0 0
    %259 = vmatpush.bf16.msra.mxu0 0
    %260 = vmatpush.bf16.msra.mxu0 0
    %261 = vmatpush.bf16.msra.mxu0 %v243
    %262 = vmatpush.bf16.msra.mxu0 %v241
    %263 = vmatpush.bf16.msra.mxu0 %v239
    %264 = vmatpush.bf16.msra.mxu0 %v237
    %265 = vmatmul.bf16.gmra.mxu0 %v255
    %v266 = vpop.f32.mrf.mxu0
    %v267 = vadd.f32 0.0, %v266
    %v268 = vpop.f32.mrf.mxu0
    %269 = vdwg.mxu0
    %270 = vmatpush.bf16.msra.mxu0 0
    %271 = vmatpush.bf16.msra.mxu0 0
    %272 = vmatpush.bf16.msra.mxu0 0
    %273 = vmatpush.bf16.msra.mxu0 0
    %274 = vmatpush.bf16.msra.mxu0 %v244
    %275 = vmatpush.bf16.msra.mxu0 %v242
    %276 = vmatpush.bf16.msra.mxu0 %v240
    %277 = vmatpush.bf16.msra.mxu0 %v238
    %278 = vmatmul.bf16.gmra.mxu0 %v255
    %v279 = vpop.f32.mrf.mxu0
    %v280 = vadd.f32 0.0, %v279
    %v281 = vpop.f32.mrf.mxu0
    %282 = vdwg.mxu0
    %v283 = vadd.f32 %v141, %v267
    %v284 = vadd.f32 %v170, %v280
    %v285 = vxor.u32 %v283, 2147483648
    %v286 = vxor.u32 %v284, 2147483648
    %v287 = vmul.f32 %v285, 1.442695
    %v288 = vpow.pop %v287
    %v289 = vmul.f32 %v286, 1.442695
    %v290 = vpow.pop %v289
    %v291 = vadd.f32 %v288, 1.0
    %v292 = vadd.f32 %v290, 1.0
    %v293 = vrcp.pop %v291
    %v294 = vmul.f32 %v291, %v293
    %v295 = vsub.f32 1.0, %v294
    %v296 = vmul.f32 %v293, %v295
    %v297 = vadd.f32 %v293, %v296
    %vm298 = vweird.f32 %v291
    %vm299 = vweird.f32 %v293
    %vm300 = vmor %vm298, %vm299
    %v301 = vsel %vm300, %v293, %v297
    %v302 = vand.u32 2147483647, %v291
    %vm303 = vcmp.eq.f32.partialorder %v302, 8.507059e+37
    %v304 = vand.u32 %v291, 2147483648
    %v305 = vor.u32 1.1754944e-38, %v304
    %v306 = vsel %vm303, %v305, %v301
    %v307 = vmul.f32 1.0, %v306
    %v308 = vrcp.pop %v292
    %v309 = vmul.f32 %v292, %v308
    %v310 = vsub.f32 1.0, %v309
    %v311 = vmul.f32 %v308, %v310
    %v312 = vadd.f32 %v308, %v311
    %vm313 = vweird.f32 %v292
    %vm314 = vweird.f32 %v308
    %vm315 = vmor %vm313, %vm314
    %v316 = vsel %vm315, %v308, %v312
    %v317 = vand.u32 2147483647, %v292
    %vm318 = vcmp.eq.f32.partialorder %v317, 8.507059e+37
    %v319 = vand.u32 %v292, 2147483648
    %v320 = vor.u32 1.1754944e-38, %v319
    %v321 = vsel %vm318, %v320, %v316
    %v322 = vmul.f32 1.0, %v321
    %v323 = vtanh.pop %v284
    %v324 = vmul.f32 %v307, 0.0
    %326 = vrot.lane.b32.xlu0 %v323, 64
    %v327 = vpop.permute.xlu0 %326
    %v329 = vmul.f32 %v307, %v327
    %331 = vrot.lane.b32.xlu0 %v329, 64
    %v332 = vpop.permute.xlu0 %331
    %v334 = vadd.f32 %v324, %v332
    %v335 = vtanh.pop %v334
    %337 = vrot.lane.b32.xlu0 %v335, 64
    %v338 = vpop.permute.xlu0 %337
    %v340 = vmul.f32 %v322, %v338
    %v341 = vsel %vm205, %v340, 0.0
    %343 = vrot.lane.b32.xlu0 %v334, 64
    %v344 = vpop.permute.xlu0 %343
    %v346 = vsel %vm205, %v344, 0.0
    %v347 = vpack.c.bf16 %v341, %v341
    %v349 = vsel %vm253, %v347, 0
    %351 = vmatpush.bf16.msra.mxu0 0
    %352 = vmatpush.bf16.msra.mxu0 0
    %353 = vmatpush.bf16.msra.mxu0 0
    %354 = vmatpush.bf16.msra.mxu0 0
    %355 = vmatpush.bf16.msra.mxu0 %v243
    %356 = vmatpush.bf16.msra.mxu0 %v241
    %357 = vmatpush.bf16.msra.mxu0 %v239
    %358 = vmatpush.bf16.msra.mxu0 %v237
    %359 = vmatmul.bf16.gmra.mxu0 %v349
    %v360 = vpop.f32.mrf.mxu0
    %v361 = vadd.f32 0.0, %v360
    %v362 = vpop.f32.mrf.mxu0
    %363 = vdwg.mxu0
    %364 = vmatpush.bf16.msra.mxu0 0
    %365 = vmatpush.bf16.msra.mxu0 0
    %366 = vmatpush.bf16.msra.mxu0 0
    %367 = vmatpush.bf16.msra.mxu0 0
    %368 = vmatpush.bf16.msra.mxu0 %v244
    %369 = vmatpush.bf16.msra.mxu0 %v242
    %370 = vmatpush.bf16.msra.mxu0 %v240
    %371 = vmatpush.bf16.msra.mxu0 %v238
    %372 = vmatmul.bf16.gmra.mxu0 %v349
    %v373 = vpop.f32.mrf.mxu0
    %v374 = vadd.f32 0.0, %v373
    %v375 = vpop.f32.mrf.mxu0
    %376 = vdwg.mxu0
    %v377 = vadd.f32 %v143, %v361
    %v378 = vadd.f32 %v172, %v374
    %v379 = vxor.u32 %v377, 2147483648
    %v380 = vxor.u32 %v378, 2147483648
    %v381 = vmul.f32 %v379, 1.442695
    %v382 = vpow.pop %v381
    %v383 = vmul.f32 %v380, 1.442695
    %v384 = vpow.pop %v383
    %v385 = vadd.f32 %v382, 1.0
    %v386 = vadd.f32 %v384, 1.0
    %v387 = vrcp.pop %v385
    %v388 = vmul.f32 %v385, %v387
    %v389 = vsub.f32 1.0, %v388
    %v390 = vmul.f32 %v387, %v389
    %v391 = vadd.f32 %v387, %v390
    %vm392 = vweird.f32 %v385
    %vm393 = vweird.f32 %v387
    %vm394 = vmor %vm392, %vm393
    %v395 = vsel %vm394, %v387, %v391
    %v396 = vand.u32 2147483647, %v385
    %vm397 = vcmp.eq.f32.partialorder %v396, 8.507059e+37
    %v398 = vand.u32 %v385, 2147483648
    %v399 = vor.u32 1.1754944e-38, %v398
    %v400 = vsel %vm397, %v399, %v395
    %v401 = vmul.f32 1.0, %v400
    %v402 = vrcp.pop %v386
    %v403 = vmul.f32 %v386, %v402
    %v404 = vsub.f32 1.0, %v403
    %v405 = vmul.f32 %v402, %v404
    %v406 = vadd.f32 %v402, %v405
    %vm407 = vweird.f32 %v386
    %vm408 = vweird.f32 %v402
    %vm409 = vmor %vm407, %vm408
    %v410 = vsel %vm409, %v402, %v406
    %v411 = vand.u32 2147483647, %v386
    %vm412 = vcmp.eq.f32.partialorder %v411, 8.507059e+37
    %v413 = vand.u32 %v386, 2147483648
    %v414 = vor.u32 1.1754944e-38, %v413
    %v415 = vsel %vm412, %v414, %v410
    %v416 = vmul.f32 1.0, %v415
    %v417 = vtanh.pop %v378
    %419 = vrot.lane.b32.xlu0 %v346, 64
    %v420 = vpop.permute.xlu0 %419
    %v422 = vmul.f32 %v401, %v420
    %424 = vrot.lane.b32.xlu0 %v417, 64
    %v425 = vpop.permute.xlu0 %424
    %v427 = vmul.f32 %v401, %v425
    %429 = vrot.lane.b32.xlu0 %v427, 64
    %v430 = vpop.permute.xlu0 %429
    %v432 = vadd.f32 %v422, %v430
    %v433 = vtanh.pop %v432
    %435 = vrot.lane.b32.xlu0 %v433, 64
    %v436 = vpop.permute.xlu0 %435
    %v438 = vmul.f32 %v416, %v436
    %v439 = vsel %vm206, %v438, %v341
    %441 = vrot.lane.b32.xlu0 %v432, 64
    %v442 = vpop.permute.xlu0 %441
    %v444 = vsel %vm206, %v442, %v346
    %v445 = vsel %vm206, %v438, 0.0
    %v446 = vpack.c.bf16 %v439, %v439
    %v448 = vsel %vm253, %v446, 0
    %450 = vmatpush.bf16.msra.mxu0 0
    %451 = vmatpush.bf16.msra.mxu0 0
    %452 = vmatpush.bf16.msra.mxu0 0
    %453 = vmatpush.bf16.msra.mxu0 0
    %454 = vmatpush.bf16.msra.mxu0 %v243
    %455 = vmatpush.bf16.msra.mxu0 %v241
    %456 = vmatpush.bf16.msra.mxu0 %v239
    %457 = vmatpush.bf16.msra.mxu0 %v237
    %458 = vmatmul.bf16.gmra.mxu0 %v448
    %v459 = vpop.f32.mrf.mxu0
    %v460 = vadd.f32 0.0, %v459
    %v461 = vpop.f32.mrf.mxu0
    %462 = vdwg.mxu0
    %463 = vmatpush.bf16.msra.mxu0 0
    %464 = vmatpush.bf16.msra.mxu0 0
    %465 = vmatpush.bf16.msra.mxu0 0
    %466 = vmatpush.bf16.msra.mxu0 0
    %467 = vmatpush.bf16.msra.mxu0 %v244
    %468 = vmatpush.bf16.msra.mxu0 %v242
    %469 = vmatpush.bf16.msra.mxu0 %v240
    %470 = vmatpush.bf16.msra.mxu0 %v238
    %471 = vmatmul.bf16.gmra.mxu0 %v448
    %v472 = vpop.f32.mrf.mxu0
    %v473 = vadd.f32 0.0, %v472
    %v474 = vpop.f32.mrf.mxu0
    %475 = vdwg.mxu0
    %v476 = vadd.f32 %v146, %v460
    %v477 = vadd.f32 %v175, %v473
    %v478 = vxor.u32 %v476, 2147483648
    %v479 = vxor.u32 %v477, 2147483648
    %v480 = vmul.f32 %v478, 1.442695
    %v481 = vpow.pop %v480
    %v482 = vmul.f32 %v479, 1.442695
    %v483 = vpow.pop %v482
    %v484 = vadd.f32 %v481, 1.0
    %v485 = vadd.f32 %v483, 1.0
    %v486 = vrcp.pop %v484
    %v487 = vmul.f32 %v484, %v486
    %v488 = vsub.f32 1.0, %v487
    %v489 = vmul.f32 %v486, %v488
    %v490 = vadd.f32 %v486, %v489
    %vm491 = vweird.f32 %v484
    %vm492 = vweird.f32 %v486
    %vm493 = vmor %vm491, %vm492
    %v494 = vsel %vm493, %v486, %v490
    %v495 = vand.u32 2147483647, %v484
    %vm496 = vcmp.eq.f32.partialorder %v495, 8.507059e+37
    %v497 = vand.u32 %v484, 2147483648
    %v498 = vor.u32 1.1754944e-38, %v497
    %v499 = vsel %vm496, %v498, %v494
    %v500 = vmul.f32 1.0, %v499
    %v501 = vrcp.pop %v485
    %v502 = vmul.f32 %v485, %v501
    %v503 = vsub.f32 1.0, %v502
    %v504 = vmul.f32 %v501, %v503
    %v505 = vadd.f32 %v501, %v504
    %vm506 = vweird.f32 %v485
    %vm507 = vweird.f32 %v501
    %vm508 = vmor %vm506, %vm507
    %v509 = vsel %vm508, %v501, %v505
    %v510 = vand.u32 2147483647, %v485
    %vm511 = vcmp.eq.f32.partialorder %v510, 8.507059e+37
    %v512 = vand.u32 %v485, 2147483648
    %v513 = vor.u32 1.1754944e-38, %v512
    %v514 = vsel %vm511, %v513, %v509
    %v515 = vmul.f32 1.0, %v514
    %v516 = vtanh.pop %v477
    %518 = vrot.lane.b32.xlu0 %v444, 64
    %v519 = vpop.permute.xlu0 %518
    %v521 = vmul.f32 %v500, %v519
    %523 = vrot.lane.b32.xlu0 %v516, 64
    %v524 = vpop.permute.xlu0 %523
    %v526 = vmul.f32 %v500, %v524
    %528 = vrot.lane.b32.xlu0 %v526, 64
    %v529 = vpop.permute.xlu0 %528
    %v531 = vadd.f32 %v521, %v529
    %v532 = vtanh.pop %v531
    %534 = vrot.lane.b32.xlu0 %v532, 64
    %v535 = vpop.permute.xlu0 %534
    %v537 = vmul.f32 %v515, %v535
    %v538 = vsel %vm207, %v537, %v439
    %540 = vrot.lane.b32.xlu0 %v531, 64
    %v541 = vpop.permute.xlu0 %540
    %v543 = vsel %vm207, %v541, %v444
    %v544 = vsel %vm207, %v537, 0.0
    %v545 = vpack.c.bf16 %v538, %v538
    %v547 = vsel %vm253, %v545, 0
    %549 = vmatpush.bf16.msra.mxu0 0
    %550 = vmatpush.bf16.msra.mxu0 0
    %551 = vmatpush.bf16.msra.mxu0 0
    %552 = vmatpush.bf16.msra.mxu0 0
    %553 = vmatpush.bf16.msra.mxu0 %v243
    %554 = vmatpush.bf16.msra.mxu0 %v241
    %555 = vmatpush.bf16.msra.mxu0 %v239
    %556 = vmatpush.bf16.msra.mxu0 %v237
    %557 = vmatmul.bf16.gmra.mxu0 %v547
    %v558 = vpop.f32.mrf.mxu0
    %v559 = vadd.f32 0.0, %v558
    %v560 = vpop.f32.mrf.mxu0
    %561 = vdwg.mxu0
    %562 = vmatpush.bf16.msra.mxu0 0
    %563 = vmatpush.bf16.msra.mxu0 0
    %564 = vmatpush.bf16.msra.mxu0 0
    %565 = vmatpush.bf16.msra.mxu0 0
    %566 = vmatpush.bf16.msra.mxu0 %v244
    %567 = vmatpush.bf16.msra.mxu0 %v242
    %568 = vmatpush.bf16.msra.mxu0 %v240
    %569 = vmatpush.bf16.msra.mxu0 %v238
    %570 = vmatmul.bf16.gmra.mxu0 %v547
    %v571 = vpop.f32.mrf.mxu0
    %v572 = vadd.f32 0.0, %v571
    %v573 = vpop.f32.mrf.mxu0
    %574 = vdwg.mxu0
    %v575 = vadd.f32 %v148, %v559
    %v576 = vadd.f32 %v177, %v572
    %v577 = vxor.u32 %v575, 2147483648
    %v578 = vxor.u32 %v576, 2147483648
    %v579 = vmul.f32 %v577, 1.442695
    %v580 = vpow.pop %v579
    %v581 = vmul.f32 %v578, 1.442695
    %v582 = vpow.pop %v581
    %v583 = vadd.f32 %v580, 1.0
    %v584 = vadd.f32 %v582, 1.0
    %v585 = vrcp.pop %v583
    %v586 = vmul.f32 %v583, %v585
    %v587 = vsub.f32 1.0, %v586
    %v588 = vmul.f32 %v585, %v587
    %v589 = vadd.f32 %v585, %v588
    %vm590 = vweird.f32 %v583
    %vm591 = vweird.f32 %v585
    %vm592 = vmor %vm590, %vm591
    %v593 = vsel %vm592, %v585, %v589
    %v594 = vand.u32 2147483647, %v583
    %vm595 = vcmp.eq.f32.partialorder %v594, 8.507059e+37
    %v596 = vand.u32 %v583, 2147483648
    %v597 = vor.u32 1.1754944e-38, %v596
    %v598 = vsel %vm595, %v597, %v593
    %v599 = vmul.f32 1.0, %v598
    %v600 = vrcp.pop %v584
    %v601 = vmul.f32 %v584, %v600
    %v602 = vsub.f32 1.0, %v601
    %v603 = vmul.f32 %v600, %v602
    %v604 = vadd.f32 %v600, %v603
    %vm605 = vweird.f32 %v584
    %vm606 = vweird.f32 %v600
    %vm607 = vmor %vm605, %vm606
    %v608 = vsel %vm607, %v600, %v604
    %v609 = vand.u32 2147483647, %v584
    %vm610 = vcmp.eq.f32.partialorder %v609, 8.507059e+37
    %v611 = vand.u32 %v584, 2147483648
    %v612 = vor.u32 1.1754944e-38, %v611
    %v613 = vsel %vm610, %v612, %v608
    %v614 = vmul.f32 1.0, %v613
    %v615 = vtanh.pop %v576
    %617 = vrot.lane.b32.xlu0 %v543, 64
    %v618 = vpop.permute.xlu0 %617
    %v620 = vmul.f32 %v599, %v618
    %622 = vrot.lane.b32.xlu0 %v615, 64
    %v623 = vpop.permute.xlu0 %622
    %v625 = vmul.f32 %v599, %v623
    %627 = vrot.lane.b32.xlu0 %v625, 64
    %v628 = vpop.permute.xlu0 %627
    %v630 = vadd.f32 %v620, %v628
    %v631 = vtanh.pop %v630
    %633 = vrot.lane.b32.xlu0 %v631, 64
    %v634 = vpop.permute.xlu0 %633
    %v636 = vmul.f32 %v614, %v634
    %v637 = vsel %vm208, %v636, %v538
    %639 = vrot.lane.b32.xlu0 %v630, 64
    %v640 = vpop.permute.xlu0 %639
    %v642 = vsel %vm208, %v640, %v543
    %v643 = vsel %vm208, %v636, 0.0
    %v644 = vpack.c.bf16 %v637, %v637
    %v646 = vsel %vm253, %v644, 0
    %648 = vmatpush.bf16.msra.mxu0 0
    %649 = vmatpush.bf16.msra.mxu0 0
    %650 = vmatpush.bf16.msra.mxu0 0
    %651 = vmatpush.bf16.msra.mxu0 0
    %652 = vmatpush.bf16.msra.mxu0 %v243
    %653 = vmatpush.bf16.msra.mxu0 %v241
    %654 = vmatpush.bf16.msra.mxu0 %v239
    %655 = vmatpush.bf16.msra.mxu0 %v237
    %656 = vmatmul.bf16.gmra.mxu0 %v646
    %v657 = vpop.f32.mrf.mxu0
    %v658 = vadd.f32 0.0, %v657
    %v659 = vpop.f32.mrf.mxu0
    %660 = vdwg.mxu0
    %661 = vmatpush.bf16.msra.mxu0 0
    %662 = vmatpush.bf16.msra.mxu0 0
    %663 = vmatpush.bf16.msra.mxu0 0
    %664 = vmatpush.bf16.msra.mxu0 0
    %665 = vmatpush.bf16.msra.mxu0 %v244
    %666 = vmatpush.bf16.msra.mxu0 %v242
    %667 = vmatpush.bf16.msra.mxu0 %v240
    %668 = vmatpush.bf16.msra.mxu0 %v238
    %669 = vmatmul.bf16.gmra.mxu0 %v646
    %v670 = vpop.f32.mrf.mxu0
    %v671 = vadd.f32 0.0, %v670
    %v672 = vpop.f32.mrf.mxu0
    %673 = vdwg.mxu0
    %v674 = vadd.f32 %v151, %v658
    %v675 = vadd.f32 %v180, %v671
    %v676 = vxor.u32 %v674, 2147483648
    %v677 = vxor.u32 %v675, 2147483648
    %v678 = vmul.f32 %v676, 1.442695
    %v679 = vpow.pop %v678
    %v680 = vmul.f32 %v677, 1.442695
    %v681 = vpow.pop %v680
    %v682 = vadd.f32 %v679, 1.0
    %v683 = vadd.f32 %v681, 1.0
    %v684 = vrcp.pop %v682
    %v685 = vmul.f32 %v682, %v684
    %v686 = vsub.f32 1.0, %v685
    %v687 = vmul.f32 %v684, %v686
    %v688 = vadd.f32 %v684, %v687
    %vm689 = vweird.f32 %v682
    %vm690 = vweird.f32 %v684
    %vm691 = vmor %vm689, %vm690
    %v692 = vsel %vm691, %v684, %v688
    %v693 = vand.u32 2147483647, %v682
    %vm694 = vcmp.eq.f32.partialorder %v693, 8.507059e+37
    %v695 = vand.u32 %v682, 2147483648
    %v696 = vor.u32 1.1754944e-38, %v695
    %v697 = vsel %vm694, %v696, %v692
    %v698 = vmul.f32 1.0, %v697
    %v699 = vrcp.pop %v683
    %v700 = vmul.f32 %v683, %v699
    %v701 = vsub.f32 1.0, %v700
    %v702 = vmul.f32 %v699, %v701
    %v703 = vadd.f32 %v699, %v702
    %vm704 = vweird.f32 %v683
    %vm705 = vweird.f32 %v699
    %vm706 = vmor %vm704, %vm705
    %v707 = vsel %vm706, %v699, %v703
    %v708 = vand.u32 2147483647, %v683
    %vm709 = vcmp.eq.f32.partialorder %v708, 8.507059e+37
    %v710 = vand.u32 %v683, 2147483648
    %v711 = vor.u32 1.1754944e-38, %v710
    %v712 = vsel %vm709, %v711, %v707
    %v713 = vmul.f32 1.0, %v712
    %v714 = vtanh.pop %v675
    %716 = vrot.lane.b32.xlu0 %v642, 64
    %v717 = vpop.permute.xlu0 %716
    %v719 = vmul.f32 %v698, %v717
    %721 = vrot.lane.b32.xlu0 %v714, 64
    %v722 = vpop.permute.xlu0 %721
    %v724 = vmul.f32 %v698, %v722
    %726 = vrot.lane.b32.xlu0 %v724, 64
    %v727 = vpop.permute.xlu0 %726
    %v729 = vadd.f32 %v719, %v727
    %v730 = vtanh.pop %v729
    %732 = vrot.lane.b32.xlu0 %v730, 64
    %v733 = vpop.permute.xlu0 %732
    %v735 = vmul.f32 %v713, %v733
    %v736 = vsel %vm209, %v735, %v637
    %738 = vrot.lane.b32.xlu0 %v729, 64
    %v739 = vpop.permute.xlu0 %738
    %v741 = vsel %vm209, %v739, %v642
    %v742 = vsel %vm209, %v735, 0.0
    %v743 = vpack.c.bf16 %v736, %v736
    %v745 = vsel %vm253, %v743, 0
    %747 = vmatpush.bf16.msra.mxu0 0
    %748 = vmatpush.bf16.msra.mxu0 0
    %749 = vmatpush.bf16.msra.mxu0 0
    %750 = vmatpush.bf16.msra.mxu0 0
    %751 = vmatpush.bf16.msra.mxu0 %v243
    %752 = vmatpush.bf16.msra.mxu0 %v241
    %753 = vmatpush.bf16.msra.mxu0 %v239
    %754 = vmatpush.bf16.msra.mxu0 %v237
    %755 = vmatmul.bf16.gmra.mxu0 %v745
    %v756 = vpop.f32.mrf.mxu0
    %v757 = vadd.f32 0.0, %v756
    %v758 = vpop.f32.mrf.mxu0
    %759 = vdwg.mxu0
    %760 = vmatpush.bf16.msra.mxu0 0
    %761 = vmatpush.bf16.msra.mxu0 0
    %762 = vmatpush.bf16.msra.mxu0 0
    %763 = vmatpush.bf16.msra.mxu0 0
    %764 = vmatpush.bf16.msra.mxu0 %v244
    %765 = vmatpush.bf16.msra.mxu0 %v242
    %766 = vmatpush.bf16.msra.mxu0 %v240
    %767 = vmatpush.bf16.msra.mxu0 %v238
    %768 = vmatmul.bf16.gmra.mxu0 %v745
    %v769 = vpop.f32.mrf.mxu0
    %v770 = vadd.f32 0.0, %v769
    %v771 = vpop.f32.mrf.mxu0
    %772 = vdwg.mxu0
    %v773 = vadd.f32 %v153, %v757
    %v774 = vadd.f32 %v182, %v770
    %v775 = vxor.u32 %v773, 2147483648
    %v776 = vxor.u32 %v774, 2147483648
    %v777 = vmul.f32 %v775, 1.442695
    %v778 = vpow.pop %v777
    %v779 = vmul.f32 %v776, 1.442695
    %v780 = vpow.pop %v779
    %v781 = vadd.f32 %v778, 1.0
    %v782 = vadd.f32 %v780, 1.0
    %v783 = vrcp.pop %v781
    %v784 = vmul.f32 %v781, %v783
    %v785 = vsub.f32 1.0, %v784
    %v786 = vmul.f32 %v783, %v785
    %v787 = vadd.f32 %v783, %v786
    %vm788 = vweird.f32 %v781
    %vm789 = vweird.f32 %v783
    %vm790 = vmor %vm788, %vm789
    %v791 = vsel %vm790, %v783, %v787
    %v792 = vand.u32 2147483647, %v781
    %vm793 = vcmp.eq.f32.partialorder %v792, 8.507059e+37
    %v794 = vand.u32 %v781, 2147483648
    %v795 = vor.u32 1.1754944e-38, %v794
    %v796 = vsel %vm793, %v795, %v791
    %v797 = vmul.f32 1.0, %v796
    %v798 = vrcp.pop %v782
    %v799 = vmul.f32 %v782, %v798
    %v800 = vsub.f32 1.0, %v799
    %v801 = vmul.f32 %v798, %v800
    %v802 = vadd.f32 %v798, %v801
    %vm803 = vweird.f32 %v782
    %vm804 = vweird.f32 %v798
    %vm805 = vmor %vm803, %vm804
    %v806 = vsel %vm805, %v798, %v802
    %v807 = vand.u32 2147483647, %v782
    %vm808 = vcmp.eq.f32.partialorder %v807, 8.507059e+37
    %v809 = vand.u32 %v782, 2147483648
    %v810 = vor.u32 1.1754944e-38, %v809
    %v811 = vsel %vm808, %v810, %v806
    %v812 = vmul.f32 1.0, %v811
    %v813 = vtanh.pop %v774
    %815 = vrot.lane.b32.xlu0 %v741, 64
    %v816 = vpop.permute.xlu0 %815
    %v818 = vmul.f32 %v797, %v816
    %820 = vrot.lane.b32.xlu0 %v813, 64
    %v821 = vpop.permute.xlu0 %820
    %v823 = vmul.f32 %v797, %v821
    %825 = vrot.lane.b32.xlu0 %v823, 64
    %v826 = vpop.permute.xlu0 %825
    %v828 = vadd.f32 %v818, %v826
    %v829 = vtanh.pop %v828
    %831 = vrot.lane.b32.xlu0 %v829, 64
    %v832 = vpop.permute.xlu0 %831
    %v834 = vmul.f32 %v812, %v832
    %v835 = vsel %vm210, %v834, %v736
    %837 = vrot.lane.b32.xlu0 %v828, 64
    %v838 = vpop.permute.xlu0 %837
    %v840 = vsel %vm210, %v838, %v741
    %v841 = vsel %vm210, %v834, 0.0
    %v842 = vpack.c.bf16 %v835, %v835
    %v844 = vsel %vm253, %v842, 0
    %846 = vmatpush.bf16.msra.mxu0 0
    %847 = vmatpush.bf16.msra.mxu0 0
    %848 = vmatpush.bf16.msra.mxu0 0
    %849 = vmatpush.bf16.msra.mxu0 0
    %850 = vmatpush.bf16.msra.mxu0 %v243
    %851 = vmatpush.bf16.msra.mxu0 %v241
    %852 = vmatpush.bf16.msra.mxu0 %v239
    %853 = vmatpush.bf16.msra.mxu0 %v237
    %854 = vmatmul.bf16.gmra.mxu0 %v844
    %v855 = vpop.f32.mrf.mxu0
    %v856 = vadd.f32 0.0, %v855
    %v857 = vpop.f32.mrf.mxu0
    %858 = vdwg.mxu0
    %859 = vmatpush.bf16.msra.mxu0 0
    %860 = vmatpush.bf16.msra.mxu0 0
    %861 = vmatpush.bf16.msra.mxu0 0
    %862 = vmatpush.bf16.msra.mxu0 0
    %863 = vmatpush.bf16.msra.mxu0 %v244
    %864 = vmatpush.bf16.msra.mxu0 %v242
    %865 = vmatpush.bf16.msra.mxu0 %v240
    %866 = vmatpush.bf16.msra.mxu0 %v238
    %867 = vmatmul.bf16.gmra.mxu0 %v844
    %v868 = vpop.f32.mrf.mxu0
    %v869 = vadd.f32 0.0, %v868
    %v870 = vpop.f32.mrf.mxu0
    %871 = vdwg.mxu0
    %v872 = vadd.f32 %v156, %v856
    %v873 = vadd.f32 %v185, %v869
    %v874 = vxor.u32 %v872, 2147483648
    %v875 = vxor.u32 %v873, 2147483648
    %v876 = vmul.f32 %v874, 1.442695
    %v877 = vpow.pop %v876
    %v878 = vmul.f32 %v875, 1.442695
    %v879 = vpow.pop %v878
    %v880 = vadd.f32 %v877, 1.0
    %v881 = vadd.f32 %v879, 1.0
    %v882 = vrcp.pop %v880
    %v883 = vmul.f32 %v880, %v882
    %v884 = vsub.f32 1.0, %v883
    %v885 = vmul.f32 %v882, %v884
    %v886 = vadd.f32 %v882, %v885
    %vm887 = vweird.f32 %v880
    %vm888 = vweird.f32 %v882
    %vm889 = vmor %vm887, %vm888
    %v890 = vsel %vm889, %v882, %v886
    %v891 = vand.u32 2147483647, %v880
    %vm892 = vcmp.eq.f32.partialorder %v891, 8.507059e+37
    %v893 = vand.u32 %v880, 2147483648
    %v894 = vor.u32 1.1754944e-38, %v893
    %v895 = vsel %vm892, %v894, %v890
    %v896 = vmul.f32 1.0, %v895
    %v897 = vrcp.pop %v881
    %v898 = vmul.f32 %v881, %v897
    %v899 = vsub.f32 1.0, %v898
    %v900 = vmul.f32 %v897, %v899
    %v901 = vadd.f32 %v897, %v900
    %vm902 = vweird.f32 %v881
    %vm903 = vweird.f32 %v897
    %vm904 = vmor %vm902, %vm903
    %v905 = vsel %vm904, %v897, %v901
    %v906 = vand.u32 2147483647, %v881
    %vm907 = vcmp.eq.f32.partialorder %v906, 8.507059e+37
    %v908 = vand.u32 %v881, 2147483648
    %v909 = vor.u32 1.1754944e-38, %v908
    %v910 = vsel %vm907, %v909, %v905
    %v911 = vmul.f32 1.0, %v910
    %v912 = vtanh.pop %v873
    %914 = vrot.lane.b32.xlu0 %v840, 64
    %v915 = vpop.permute.xlu0 %914
    %v917 = vmul.f32 %v896, %v915
    %919 = vrot.lane.b32.xlu0 %v912, 64
    %v920 = vpop.permute.xlu0 %919
    %v922 = vmul.f32 %v896, %v920
    %924 = vrot.lane.b32.xlu0 %v922, 64
    %v925 = vpop.permute.xlu0 %924
    %v927 = vadd.f32 %v917, %v925
    %v928 = vtanh.pop %v927
    %930 = vrot.lane.b32.xlu0 %v928, 64
    %v931 = vpop.permute.xlu0 %930
    %v933 = vmul.f32 %v911, %v931
    %v934 = vsel %vm211, %v933, %v835
    %936 = vrot.lane.b32.xlu0 %v927, 64
    %v937 = vpop.permute.xlu0 %936
    %v939 = vsel %vm211, %v937, %v840
    %v940 = vsel %vm211, %v933, 0.0
    %v941 = vpack.c.bf16 %v934, %v934
    %v943 = vsel %vm253, %v941, 0
    %945 = vmatpush.bf16.msra.mxu0 0
    %946 = vmatpush.bf16.msra.mxu0 0
    %947 = vmatpush.bf16.msra.mxu0 0
    %948 = vmatpush.bf16.msra.mxu0 0
    %949 = vmatpush.bf16.msra.mxu0 %v243
    %950 = vmatpush.bf16.msra.mxu0 %v241
    %951 = vmatpush.bf16.msra.mxu0 %v239
    %952 = vmatpush.bf16.msra.mxu0 %v237
    %953 = vmatmul.bf16.gmra.mxu0 %v943
    %v954 = vpop.f32.mrf.mxu0
    %v955 = vadd.f32 0.0, %v954
    %v956 = vpop.f32.mrf.mxu0
    %957 = vdwg.mxu0
    %958 = vmatpush.bf16.msra.mxu0 0
    %959 = vmatpush.bf16.msra.mxu0 0
    %960 = vmatpush.bf16.msra.mxu0 0
    %961 = vmatpush.bf16.msra.mxu0 0
    %962 = vmatpush.bf16.msra.mxu0 %v244
    %963 = vmatpush.bf16.msra.mxu0 %v242
    %964 = vmatpush.bf16.msra.mxu0 %v240
    %965 = vmatpush.bf16.msra.mxu0 %v238
    %966 = vmatmul.bf16.gmra.mxu0 %v943
    %v967 = vpop.f32.mrf.mxu0
    %v968 = vadd.f32 0.0, %v967
    %v969 = vpop.f32.mrf.mxu0
    %970 = vdwg.mxu0
    %v971 = vadd.f32 %v158, %v955
    %v972 = vadd.f32 %v187, %v968
    %v973 = vxor.u32 %v971, 2147483648
    %v974 = vxor.u32 %v972, 2147483648
    %v975 = vmul.f32 %v973, 1.442695
    %v976 = vpow.pop %v975
    %v977 = vmul.f32 %v974, 1.442695
    %v978 = vpow.pop %v977
    %v979 = vadd.f32 %v976, 1.0
    %v980 = vadd.f32 %v978, 1.0
    %v981 = vrcp.pop %v979
    %v982 = vmul.f32 %v979, %v981
    %v983 = vsub.f32 1.0, %v982
    %v984 = vmul.f32 %v981, %v983
    %v985 = vadd.f32 %v981, %v984
    %vm986 = vweird.f32 %v979
    %vm987 = vweird.f32 %v981
    %vm988 = vmor %vm986, %vm987
    %v989 = vsel %vm988, %v981, %v985
    %v990 = vand.u32 2147483647, %v979
    %vm991 = vcmp.eq.f32.partialorder %v990, 8.507059e+37
    %v992 = vand.u32 %v979, 2147483648
    %v993 = vor.u32 1.1754944e-38, %v992
    %v994 = vsel %vm991, %v993, %v989
    %v995 = vmul.f32 1.0, %v994
    %v996 = vrcp.pop %v980
    %v997 = vmul.f32 %v980, %v996
    %v998 = vsub.f32 1.0, %v997
    %v999 = vmul.f32 %v996, %v998
    %v1000 = vadd.f32 %v996, %v999
    %vm1001 = vweird.f32 %v980
    %vm1002 = vweird.f32 %v996
    %vm1003 = vmor %vm1001, %vm1002
    %v1004 = vsel %vm1003, %v996, %v1000
    %v1005 = vand.u32 2147483647, %v980
    %vm1006 = vcmp.eq.f32.partialorder %v1005, 8.507059e+37
    %v1007 = vand.u32 %v980, 2147483648
    %v1008 = vor.u32 1.1754944e-38, %v1007
    %v1009 = vsel %vm1006, %v1008, %v1004
    %v1010 = vmul.f32 1.0, %v1009
    %v1011 = vtanh.pop %v972
    %1013 = vrot.lane.b32.xlu0 %v939, 64
    %v1014 = vpop.permute.xlu0 %1013
    %v1016 = vmul.f32 %v995, %v1014
    %1018 = vrot.lane.b32.xlu0 %v1011, 64
    %v1019 = vpop.permute.xlu0 %1018
    %v1021 = vmul.f32 %v995, %v1019
    %1023 = vrot.lane.b32.xlu0 %v1021, 64
    %v1024 = vpop.permute.xlu0 %1023
    %v1026 = vadd.f32 %v1016, %v1024
    %v1027 = vtanh.pop %v1026
    %1029 = vrot.lane.b32.xlu0 %v1027, 64
    %v1030 = vpop.permute.xlu0 %1029
    %v1032 = vmul.f32 %v1010, %v1030
    %v1033 = vsel %vm212, %v1032, 0.0
    %v1034 = vsel %vm118, %v341, %v1033
    %v1035 = vsel %vm118, %v445, %v940
    %v1036 = vsel %vm118, %v544, %v841
    %v1037 = vsel %vm118, %v643, %v742
    %v1038 = vsel %vm118, %v742, %v643
    %v1039 = vsel %vm118, %v841, %v544
    %v1040 = vsel %vm118, %v940, %v445
    %v1041 = vsel %vm118, %v1033, %v341
    %v1042 = vpack.c.bf16 %v1035, %v1034
    %v1043 = vpack.c.bf16 %v1037, %v1036
    %v1044 = vpack.c.bf16 %v1039, %v1038
    %v1045 = vpack.c.bf16 %v1041, %v1040
    %v1046 = vld [vmem:[%s5] sm:$0xf]
    %v1047 = vld [vmem:[%s5 + $0x4] sm:$0xf]
    %v1048 = vld [vmem:[%s5 + $0x8] sm:$0xf]
    %v1049 = vld [vmem:[%s5 + $0xc] sm:$0xf]
    %v1050 = vld [vmem:[%s5 + $0x10] sm:$0xf]
    %v1051 = vld [vmem:[%s5 + $0x14] sm:$0xf]
    %v1052 = vld [vmem:[%s5 + $0x18] sm:$0xf]
    %v1053 = vld [vmem:[%s5 + $0x1c] sm:$0xf]
    %v1062 = vunpack.c.l.b16 %v1046
    %v1063 = vunpack.c.l.b16 %v1047
    %v1064 = vunpack.c.l.b16 %v1048
    %v1065 = vunpack.c.l.b16 %v1049
    %v1066 = vunpack.c.l.b16 %v1050
    %v1067 = vunpack.c.l.b16 %v1051
    %v1068 = vunpack.c.l.b16 %v1052
    %v1069 = vunpack.c.l.b16 %v1053
    %v1070 = vpack.c.b16 %v1063, %v1062
    %v1071 = vpack.c.b16 %v1065, %v1064
    %v1072 = vpack.c.b16 %v1067, %v1066
    %v1073 = vpack.c.b16 %v1069, %v1068
    %v1079 = vsel %vm253, %v1042, 0
    %v1082 = vsel %vm253, %v1043, 0
    %v1085 = vsel %vm253, %v1044, 0
    %v1088 = vsel %vm253, %v1045, 0
    %1090 = vmatpush.bf16.msra.mxu0 0
    %1091 = vmatpush.bf16.msra.mxu0 0
    %1092 = vmatpush.bf16.msra.mxu0 0
    %1093 = vmatpush.bf16.msra.mxu0 0
    %1094 = vmatpush.bf16.msra.mxu0 %v1073
    %1095 = vmatpush.bf16.msra.mxu0 %v1072
    %1096 = vmatpush.bf16.msra.mxu0 %v1071
    %1097 = vmatpush.bf16.msra.mxu0 %v1070
    %1098 = vmatmul.bf16.gmra.mxu0 %v1079
    %v1099 = vpop.f32.mrf.mxu0
    %v1100 = vadd.f32 0.0, %v1099
    %v1101 = vpop.f32.mrf.mxu0
    %v1102 = vadd.f32 0.0, %v1101
    %1103 = vmatmul.bf16.gmra.mxu0 %v1082
    %v1104 = vpop.f32.mrf.mxu0
    %v1105 = vadd.f32 0.0, %v1104
    %v1106 = vpop.f32.mrf.mxu0
    %v1107 = vadd.f32 0.0, %v1106
    %1108 = vmatmul.bf16.gmra.mxu0 %v1085
    %v1109 = vpop.f32.mrf.mxu0
    %v1110 = vadd.f32 0.0, %v1109
    %v1111 = vpop.f32.mrf.mxu0
    %v1112 = vadd.f32 0.0, %v1111
    %1113 = vmatmul.bf16.gmra.mxu0 %v1088
    %v1114 = vpop.f32.mrf.mxu0
    %v1115 = vadd.f32 0.0, %v1114
    %v1116 = vpop.f32.mrf.mxu0
    %v1117 = vadd.f32 0.0, %v1116
    %1118 = vdwg.mxu0
    %v1119 = vtanh.pop %v1100
    %v1120 = vtanh.pop %v1102
    %v1121 = vtanh.pop %v1105
    %v1122 = vtanh.pop %v1107
    %v1123 = vtanh.pop %v1110
    %v1124 = vtanh.pop %v1112
    %v1125 = vtanh.pop %v1115
    %v1126 = vtanh.pop %v1117
    %v1127 = vld [vmem:[%s6] sm:$0x1]
    %v1129 = vperm.slane %v1127, 0
    %v1131 = vmul.f32 %v1119, %v1129
    %v1132 = vmul.f32 %v1120, %v1129
    %v1133 = vmul.f32 %v1121, %v1129
    %v1134 = vmul.f32 %v1122, %v1129
    %v1135 = vmul.f32 %v1123, %v1129
    %v1136 = vmul.f32 %v1124, %v1129
    %v1137 = vmul.f32 %v1125, %v1129
    %v1138 = vmul.f32 %v1126, %v1129
    %vm1139 = vcmask 130048
    %v1140 = vsel %vm1139, %v1131, 0.0
    %1141 = vadd.xlane.f32.xlu0 %v1140
    %v1142 = vpop.xlane.xlu0 %1141
    %v1143 = vsel %vm1139, %v1132, 0.0
    %1144 = vadd.xlane.f32.xlu0 %v1143
    %v1145 = vpop.xlane.xlu0 %1144
    %v1146 = vsel %vm1139, %v1133, 0.0
    %1147 = vadd.xlane.f32.xlu0 %v1146
    %v1148 = vpop.xlane.xlu0 %1147
    %v1149 = vsel %vm1139, %v1134, 0.0
    %1150 = vadd.xlane.f32.xlu0 %v1149
    %v1151 = vpop.xlane.xlu0 %1150
    %v1152 = vsel %vm1139, %v1135, 0.0
    %1153 = vadd.xlane.f32.xlu0 %v1152
    %v1154 = vpop.xlane.xlu0 %1153
    %v1155 = vsel %vm1139, %v1136, 0.0
    %1156 = vadd.xlane.f32.xlu0 %v1155
    %v1157 = vpop.xlane.xlu0 %1156
    %v1158 = vsel %vm1139, %v1137, 0.0
    %1159 = vadd.xlane.f32.xlu0 %v1158
    %v1160 = vpop.xlane.xlu0 %1159
    %v1161 = vsel %vm1139, %v1138, 0.0
    %1162 = vadd.xlane.f32.xlu0 %v1161
    %v1163 = vpop.xlane.xlu0 %1162
    %v1164 = vmax.f32 %v1142, %v1145
    %v1165 = vmax.f32 %v1164, %v1148
    %v1166 = vmax.f32 %v1165, %v1151
    %v1167 = vmax.f32 %v1166, %v1154
    %v1168 = vmax.f32 %v1167, %v1157
    %v1169 = vmax.f32 %v1168, %v1160
    %v1170 = vmax.f32 %v1169, %v1163
    %v1171 = vsub.f32 %v1142, %v1170
    %v1172 = vmul.f32 %v1171, 1.442695
    %v1173 = vpow.pop %v1172
    %v1174 = vsub.f32 %v1145, %v1170
    %v1175 = vmul.f32 %v1174, 1.442695
    %v1176 = vpow.pop %v1175
    %v1177 = vsub.f32 %v1148, %v1170
    %v1178 = vmul.f32 %v1177, 1.442695
    %v1179 = vpow.pop %v1178
    %v1180 = vsub.f32 %v1151, %v1170
    %v1181 = vmul.f32 %v1180, 1.442695
    %v1182 = vpow.pop %v1181
    %v1183 = vsub.f32 %v1154, %v1170
    %v1184 = vmul.f32 %v1183, 1.442695
    %v1185 = vpow.pop %v1184
    %v1186 = vsub.f32 %v1157, %v1170
    %v1187 = vmul.f32 %v1186, 1.442695
    %v1188 = vpow.pop %v1187
    %v1189 = vsub.f32 %v1160, %v1170
    %v1190 = vmul.f32 %v1189, 1.442695
    %v1191 = vpow.pop %v1190
    %v1192 = vsub.f32 %v1163, %v1170
    %v1193 = vmul.f32 %v1192, 1.442695
    %v1194 = vpow.pop %v1193
    %v1195 = vadd.f32 %v1173, %v1176
    %v1196 = vadd.f32 %v1195, %v1179
    %v1197 = vadd.f32 %v1196, %v1182
    %v1198 = vadd.f32 %v1197, %v1185
    %v1199 = vadd.f32 %v1198, %v1188
    %v1200 = vadd.f32 %v1199, %v1191
    %v1201 = vadd.f32 %v1200, %v1194
    %v1202 = vmul.f32 %v1173, %v1034
    %v1203 = vmul.f32 %v1176, %v1035
    %v1204 = vmul.f32 %v1179, %v1036
    %v1205 = vmul.f32 %v1182, %v1037
    %v1206 = vmul.f32 %v1185, %v1038
    %v1207 = vmul.f32 %v1188, %v1039
    %v1208 = vmul.f32 %v1191, %v1040
    %v1209 = vmul.f32 %v1194, %v1041
    %v1210 = vadd.f32 %v1202, %v1203
    %v1211 = vadd.f32 %v1210, %v1204
    %v1212 = vadd.f32 %v1211, %v1205
    %v1213 = vadd.f32 %v1212, %v1206
    %v1214 = vadd.f32 %v1213, %v1207
    %v1215 = vadd.f32 %v1214, %v1208
    %v1216 = vadd.f32 %v1215, %v1209
    %v1217 = vrcp.pop %v1201
    %v1218 = vmul.f32 %v1216, %v1217
    %1219 = vst.msk [vmem:[#allocation7] sm:$0xff] %vm253, %v1218
    // Predicated region
    $region38: #{tpu_custom_call.1} parent=1 // pred_check
      _
    $region39: #{tpu_custom_call.1} parent=1 // pred_check_branch
      %1221 = sbr.rel (0) target = $region41
    $region40: #{tpu_custom_call.1} parent=1 // pred_region
      %1223 = vsyncadd [#allocation4], 0
      %s1225 = sshll.u32 [#allocation7], 4
      %s1226 = int_to_ptr.vmem [resolvable:$true] %s1225
      %s1227 = sshll.u32 %s7, 4
      %s1228 = int_to_ptr.hbm [resolvable:$true] %s1227
      %1230 = dma.vmem_to_hbm [thread:$0]  %s1226, 128, %s1228, [#allocation4]
    $region41: #{tpu_custom_call.1} parent=1 // pred_fallthru
      _
    // Predicated region
    $region42: #{tpu_custom_call.1} parent=1 // pred_check
      _
    $region43: #{tpu_custom_call.1} parent=1 // pred_check_branch
      %1232 = sbr.rel (0) target = $region45
    $region44: #{tpu_custom_call.1} parent=1 // pred_region
      %1234 = dma.done [#allocation4], 128
    $region45: #{tpu_custom_call.1} parent=1 // pred_fallthru
      _
    %1235 = vsyncpa [#allocation3], 1
    %1236 = vsyncpa [#allocation6], 1
    %1237 = vsyncpa [#allocation4], 1

</llo_original>
